<compile_context>
chip_gen: v7x
topology: tpu7x:2x2x1
jax: 0.10.0
libtpu: 0.0.40
codegen_flags: <defaults>
</compile_context>

<pallas_src>
import jax
import jax.numpy as jnp
from jax.experimental import pallas as pl
from jax.experimental.pallas import tpu as pltpu


def _round_up(x, m):
    return (x + m - 1) // m * m


def _appended_and_fh(F, cross_layer_sizes, split_half):
    """Per layer: channels appended to the output and Fh (rows of h fed in)."""
    appended, fhs = [], []
    prev = F
    last = len(cross_layer_sizes) - 1
    for i, C in enumerate(cross_layer_sizes):
        fhs.append(prev)
        if split_half and i != last:
            appended.append(C // 2)
            prev = C // 2
        else:
            appended.append(C)
            prev = C
    return appended, fhs


def _pick_batch_tile(B, E, target_lanes=4096):
    """Batch tile TB such that output / reduction blocks are lane-dense:
    TB must be a multiple of 128, or the full batch (full-extent blocks are
    always legal).  Prefer >= 2 tiles so the 'parallel' grid axis can shard
    across both TensorCores on megacore parts (v7x)."""
    cands = [tb for tb in range(128, B + 1, 128) if B % tb == 0]
    if not cands:
        return B                                   # full-extent fallback
    within = [tb for tb in cands if tb * E <= target_lanes]
    pool = within if within else [min(cands)]
    multi = [tb for tb in pool if B // tb >= 2]
    pool = multi if multi else pool
    return max(pool)


def _plan_layers(F, E, cross_layer_sizes, split_half, TB, itemsize,
                 group_k_target=512, z_budget_bytes=6 * 1024 * 1024):
    """Static plan: per layer, weight ROW blocks (lo/hi split done wrapper-side
    so the kernel never slices activations along sublanes) and FIELD groups
    (group K ~ group_k_target for deep MXU contractions, capped so the assembled
    z slab stays within z_budget_bytes of VMEM)."""
    N = TB * E
    appended, fhs = _appended_and_fh(F, cross_layer_sizes, split_half)
    last = len(cross_layer_sizes) - 1
    layers, out_off, max_kg = [], 0, 0
    for i, C in enumerate(cross_layer_sizes):
        Fh = fhs[i]
        is_split = split_half and i != last
        blocks = [(0, C // 2), (C // 2, C)] if is_split else [(0, C)]
        g_budget = max(1, z_budget_bytes // max(1, Fh * N * itemsize))
        g_target = max(1, -(-group_k_target // Fh))            # ceil
        gc = max(1, min(F, g_target, g_budget))
        groups, f0 = [], 0
        while f0 < F:
            g = min(gc, F - f0)
            groups.append((f0, g))
            max_kg = max(max_kg, g * Fh)
            f0 += g
        layers.append(dict(C=C, fh=Fh, is_split=is_split, blocks=blocks,
                           groups=groups, appended=appended[i], out_off=out_off))
        out_off += _round_up(appended[i], 8)                    # 8-aligned offsets
    return layers, out_off, max_kg


def make_fused_cin_call(B, F, E, TB, layers, out_rows_pad, max_kg,
                        out_dtype, compute_dtype, single_buffer_residents=True):
    """Build the fused pallas_call.
    Flat inputs: x (F, B*E) then, per layer / row-block: one W array per field
    group (rows, G*Fh) followed by a bias (rows, 1).  Output: (out_rows_pad, B)."""
    N = TB * E
    cd = jnp.dtype(compute_dtype)
    sub = 8 if cd.itemsize >= 4 else 16
    z_rows = _round_up(max(max_kg, sub), sub)

    # Flat parameter bookkeeping (must match the wrapper's argument order).
    w_index, b_index, param_shapes = [], [], []
    p = 0
    for lp in layers:
        wi_blocks, bi_blocks = [], []
        for (r0, r1) in lp['blocks']:
            wi = []
            for (f0, gc) in lp['groups']:
                param_shapes.append((r1 - r0, gc * lp['fh']))
                wi.append(p)
                p += 1
            wi_blocks.append(wi)
            param_shapes.append((r1 - r0, 1))
            bi_blocks.append(p)
            p += 1
        w_index.append(wi_blocks)
        b_index.append(bi_blocks)
    n_params = p

    def kernel(*refs):
        x_ref = refs[0]
        params = refs[1:1 + n_params]
        out_ref = refs[1 + n_params]
        z_ref = refs[2 + n_params]

        # Block-diagonal ones pattern for the fused sum over the embed dim,
        # generated in-kernel (no HBM DMA, no extra resident buffer for it).
        lane = jax.lax.broadcasted_iota(jnp.int32, (N, TB), 0)
        col = jax.lax.broadcasted_iota(jnp.int32, (N, TB), 1)
        S = ((lane >= col * E) & (lane < (col + 1) * E)).astype(compute_dtype)

        h = x_ref[...]                                     # layer-0 h == x0, (F, N)
        for li, lp in enumerate(layers):
            Fh = lp['fh']
            nblk = len(lp['blocks'])
            # f32 accumulators start at the lane-broadcast bias.
            accs = []
            for bi, (r0, r1) in enumerate(lp['blocks']):
                b = params[b_index[li][bi]][...]           # (rows, 1) f32
                accs.append(jnp.broadcast_to(b, (r1 - r0, N)).astype(jnp.float32))
            for gi, (f0, gc) in enumerate(lp['groups']):
                kg = gc * Fh
                # Assemble the outer-product slab for this field group in VMEM.
                # The x0-row broadcast happens in-loop (never pinned across layers).
                for j in range(gc):
                    xr = x_ref[f0 + j:f0 + j + 1, :]       # (1, N) straight from VMEM
                    z_ref[j * Fh:(j + 1) * Fh, :] = (xr * h).astype(z_ref.dtype)
                zg = z_ref[0:kg, :]                        # (kg, N), deep contraction
                for bi in range(nblk):
                    w = params[w_index[li][bi][gi]][...]   # (rows, kg), pre-cast
                    accs[bi] = accs[bi] + jnp.dot(
                        w, zg, preferred_element_type=jnp.float32)
            ys = [jnp.maximum(a, 0.0) for a in accs]
            x_cur = ys[0]                                  # appended rows
            h_next = ys[1] if lp['is_split'] else ys[0]
            # Fused sum over embed: (rows, N) @ (N, TB) on the MXU, producing a
            # lane-dense (rows, TB) slab written at an 8-aligned row offset.
            s_part = jnp.dot(x_cur.astype(compute_dtype), S,
                             preferred_element_type=jnp.float32)
            off = lp['out_off']
            out_ref[off:off + lp['appended'], :] = s_part.astype(out_ref.dtype)
            h = h_next.astype(compute_dtype)

    def const_map(t):
        return (0, 0)

    resident_kwargs = {}
    if single_buffer_residents and hasattr(pl, "Buffered"):
        try:  # resident operands (constant index map) only need one buffer
            pl.BlockSpec((8, 128), const_map, pipeline_mode=pl.Buffered(1))
            resident_kwargs = dict(pipeline_mode=pl.Buffered(1))
        except TypeError:
            resident_kwargs = {}

    in_specs = [pl.BlockSpec((F, N), lambda t: (0, t))]    # x, batch-tiled on lanes
    for shp in param_shapes:
        in_specs.append(pl.BlockSpec(shp, const_map, **resident_kwargs))
    out_specs = pl.BlockSpec((out_rows_pad, TB), lambda t: (0, t))

    # Advisory cost estimate (embed-sum matmul now includes the TB factor).
    flops = 0
    for lp in layers:
        K = F * lp['fh']
        flops += 2 * lp['C'] * K * B * E            # conv matmuls
        flops += K * B * E                          # outer-product multiplies
        flops += 2 * lp['appended'] * B * E * TB    # fused embed-sum matmul
    w_bytes = sum(r * c * (4 if c == 1 else cd.itemsize) for r, c in param_shapes)
    bytes_accessed = cd.itemsize * F * B * E + 4 * out_rows_pad * B + w_bytes

    # Explicit VMEM budget: resident weights + pipelined x/out + scratch + live values.
    res_mult = 1 if resident_kwargs else 2
    work = 0
    for lp in layers:
        work = max(work, 2 * lp['C'] * N * 4 + lp['fh'] * N * cd.itemsize)
    est = (2 * F * N * cd.itemsize + 2 * out_rows_pad * TB * 4
           + z_rows * N * cd.itemsize + res_mult * w_bytes
           + N * TB * cd.itemsize + work)
    vmem_limit = int(min(max(est * 5 // 4, 32 * 1024 * 1024), 96 * 1024 * 1024))

    return pl.pallas_call(
        kernel,
        out_shape=jax.ShapeDtypeStruct((out_rows_pad, B), out_dtype),
        grid=(B // TB,),
        in_specs=in_specs,
        out_specs=out_specs,
        scratch_shapes=[pltpu.VMEM((z_rows, N), compute_dtype)],
        compiler_params=pltpu.CompilerParams(
            dimension_semantics=("parallel",),
            vmem_limit_bytes=vmem_limit),
        cost_estimate=pl.CostEstimate(flops=int(flops), transcendentals=0,
                                      bytes_accessed=int(bytes_accessed)),
    )


def cin_forward(x, weights, biases, cross_layer_sizes, split_half=True,
                target_lanes=4096, mxu_dtype=None,
                group_k_target=512, z_budget_bytes=6 * 1024 * 1024):
    """CIN forward.  x: (B, F, E) -> (B, sum of appended channel counts).

    mxu_dtype=jnp.bfloat16 enables the bf16 outer-product/matmul path with f32
    accumulation (recommended on v6e/v7x only; keep f32 on v5e, which has no
    bf16 VPU).  On v7x (64 MiB VMEM) use smaller target_lanes / z_budget_bytes.
    """
    B, F, E = x.shape
    if split_half:
        assert all(c % 2 == 0 for c in cross_layer_sizes[:-1]), \
            "split_half requires even cross_layer_sizes (except possibly the last)"
    compute_dtype = jnp.dtype(mxu_dtype) if mxu_dtype is not None else jnp.dtype(x.dtype)
    TB = _pick_batch_tile(B, E, target_lanes)
    layers, out_rows_pad, max_kg = _plan_layers(
        F, E, cross_layer_sizes, split_half, TB, compute_dtype.itemsize,
        group_k_target, z_budget_bytes)

    # Wrapper-side layout plumbing (not compute): fields on sublanes,
    # (batch, embed) flattened on lanes; weights pre-cast and pre-split into
    # row blocks (lo/hi) and field groups so the kernel never re-slices them.
    xt = jnp.transpose(x, (1, 0, 2)).reshape(F, B * E).astype(compute_dtype)
    args = [xt]
    for li, lp in enumerate(layers):
        W, b, Fh = weights[li], biases[li], lp['fh']
        for (r0, r1) in lp['blocks']:
            for (f0, gc) in lp['groups']:
                args.append(W[r0:r1, f0 * Fh:(f0 + gc) * Fh].astype(compute_dtype))
            args.append(b[r0:r1, :].astype(jnp.float32))

    def run(single_buffer):
        call = make_fused_cin_call(B, F, E, TB, layers, out_rows_pad, max_kg,
                                   out_dtype=x.dtype, compute_dtype=compute_dtype,
                                   single_buffer_residents=single_buffer)
        return call(*args)

    try:
        out_t = run(True)
    except Exception:  # older Pallas without Buffered(1): fall back to defaults
        out_t = run(False)

    # Strip the 8-row padding between layers and restore (B, sum_C).
    pieces = [out_t[lp['out_off']:lp['out_off'] + lp['appended'], :] for lp in layers]
    return jnp.concatenate(pieces, axis=0).T


def cin_reference(x, weights, biases, cross_layer_sizes, split_half=True):
    """Pure-JAX reference mirroring the PyTorch forward exactly."""
    B, F, E = x.shape
    num_layers = len(cross_layer_sizes)
    x0 = x[:, :, None, :]
    h = x
    xs = []
    for i, C in enumerate(cross_layer_sizes):
        z = (x0 * h[:, None, :, :]).reshape(B, -1, E)
        y = jnp.maximum(jnp.einsum("ck,bke->bce", weights[i], z)
                        + biases[i][None, :, :], 0.0)
        if split_half and i != num_layers - 1:
            half = C // 2
            x_cur, h = y[:, :half, :], y[:, half:, :]
        else:
            x_cur, h = y, y
        xs.append(x_cur)
    return jnp.sum(jnp.concatenate(xs, axis=1), axis=2)


if __name__ == "__main__":
    key = jax.random.PRNGKey(0)
    cross_layer_sizes = [8, 8, 4]
    split_half = True
    F, E = 4, 16

    # Deterministic parameters with the module's shapes:
    # Conv1d(F * prev_dim, C, 1, bias=True) -> weight (C, F*prev), bias (C, 1 here).
    weights, biases = [], []
    prev = F
    for C in cross_layer_sizes:
        K = F * prev
        key, kw, kb = jax.random.split(key, 3)
        weights.append(jax.random.normal(kw, (C, K), dtype=jnp.float32) * 0.1)
        biases.append(jax.random.normal(kb, (C, 1), dtype=jnp.float32) * 0.1)
        prev = C // 2 if split_half else C

    expected_dim = sum(
        (c // 2 if (split_half and i != len(cross_layer_sizes) - 1) else c)
        for i, c in enumerate(cross_layer_sizes))

    # Small single-tile case (TB == B, full-extent blocks).
    key, kx = jax.random.split(key)
    x = jax.random.normal(kx, (2, F, E), dtype=jnp.float32)
    out = jax.block_until_ready(
        cin_forward(x, weights, biases, cross_layer_sizes, split_half))
    ref = cin_reference(x, weights, biases, cross_layer_sizes, split_half)
    assert out.shape == (2, expected_dim), out.shape
    assert jnp.allclose(out, ref, atol=1e-4, rtol=1e-4)

    # Multi-tile case (TB = 128, grid = 2): exercises the lane-dense batch tiling,
    # resident single-buffered weights across grid steps, and the parallel axis.
    key, kx = jax.random.split(key)
    xb = jax.random.normal(kx, (256, F, E), dtype=jnp.float32)
    outb = jax.block_until_ready(
        cin_forward(xb, weights, biases, cross_layer_sizes, split_half))
    refb = cin_reference(xb, weights, biases, cross_layer_sizes, split_half)
    assert outb.shape == (256, expected_dim), outb.shape
    assert jnp.allclose(outb, refb, atol=1e-4, rtol=1e-4)

    # f32 end-to-end here so the 1e-4 check against the f32 reference holds.
    # (On v6e/v7x pass mxu_dtype=jnp.bfloat16 for the fast bf16 VPU/MXU path with
    #  f32 accumulation; keep f32 on v5e where bf16 casts are pure overhead.)
    # TODO(synk): self.fc (nn.Linear) is defined in the module but never used in
    # forward(), so it is intentionally not implemented here.
    print("KERNEL_OK")
</pallas_src>

<mosaic_0001>
module attributes {stable_mosaic.version = 11 : i64} {
  func.func @kernel(%arg0: i32, %arg1: memref<4x32xf32, #tpu.memory_space<vmem>>, %arg2: memref<4x16xf32, #tpu.memory_space<vmem>>, %arg3: memref<4x1xf32, #tpu.memory_space<vmem>>, %arg4: memref<4x16xf32, #tpu.memory_space<vmem>>, %arg5: memref<4x1xf32, #tpu.memory_space<vmem>>, %arg6: memref<4x16xf32, #tpu.memory_space<vmem>>, %arg7: memref<4x1xf32, #tpu.memory_space<vmem>>, %arg8: memref<4x16xf32, #tpu.memory_space<vmem>>, %arg9: memref<4x1xf32, #tpu.memory_space<vmem>>, %arg10: memref<4x16xf32, #tpu.memory_space<vmem>>, %arg11: memref<4x1xf32, #tpu.memory_space<vmem>>, %arg12: memref<24x2xf32, #tpu.memory_space<vmem>>, %arg13: memref<16x32xf32, #tpu.memory_space<vmem>>) attributes {dimension_semantics = [#tpu.dimension_semantics<parallel>], iteration_bounds = array<i64: 1>, scalar_prefetch = 0 : i64, scratch_operands = 1 : i64, tpu.core_type = #tpu.core_type<tc>, window_params = [{transform_indices = @transform_0, window_bounds = array<i64: 4, 32>}, {pipeline_mode = #tpu.pipeline_mode<synchronous>, transform_indices = @transform_1, window_bounds = array<i64: 4, 16>}, {pipeline_mode = #tpu.pipeline_mode<synchronous>, transform_indices = @transform_2, window_bounds = array<i64: 4, 1>}, {pipeline_mode = #tpu.pipeline_mode<synchronous>, transform_indices = @transform_3, window_bounds = array<i64: 4, 16>}, {pipeline_mode = #tpu.pipeline_mode<synchronous>, transform_indices = @transform_4, window_bounds = array<i64: 4, 1>}, {pipeline_mode = #tpu.pipeline_mode<synchronous>, transform_indices = @transform_5, window_bounds = array<i64: 4, 16>}, {pipeline_mode = #tpu.pipeline_mode<synchronous>, transform_indices = @transform_6, window_bounds = array<i64: 4, 1>}, {pipeline_mode = #tpu.pipeline_mode<synchronous>, transform_indices = @transform_7, window_bounds = array<i64: 4, 16>}, {pipeline_mode = #tpu.pipeline_mode<synchronous>, transform_indices = @transform_8, window_bounds = array<i64: 4, 1>}, {pipeline_mode = #tpu.pipeline_mode<synchronous>, transform_indices = @transform_9, window_bounds = array<i64: 4, 16>}, {pipeline_mode = #tpu.pipeline_mode<synchronous>, transform_indices = @transform_10, window_bounds = array<i64: 4, 1>}, {transform_indices = @transform_11, window_bounds = array<i64: 24, 2>}]} {
    %0 = tpu.iota {dimensions = array<i32: 0>} : vector<32x2xi32>
    %1 = tpu.iota {dimensions = array<i32: 1>} : vector<32x2xi32>
    %c16_i32 = arith.constant 16 : i32
    %2 = vector.broadcast %c16_i32 : i32 to vector<32x2xi32>
    %3 = arith.muli %1, %2 : vector<32x2xi32>
    %4 = arith.cmpi sge, %0, %3 : vector<32x2xi32>
    %c1_i32 = arith.constant 1 : i32
    %5 = vector.broadcast %c1_i32 : i32 to vector<32x2xi32>
    %6 = arith.addi %1, %5 : vector<32x2xi32>
    %c16_i32_0 = arith.constant 16 : i32
    %7 = vector.broadcast %c16_i32_0 : i32 to vector<32x2xi32>
    %8 = arith.muli %6, %7 : vector<32x2xi32>
    %9 = arith.cmpi slt, %0, %8 : vector<32x2xi32>
    %10 = arith.andi %4, %9 : vector<32x2xi1>
    %11 = arith.extui %10 : vector<32x2xi1> to vector<32x2xi32>
    %12 = arith.sitofp %11 : vector<32x2xi32> to vector<32x2xf32>
    %c0 = arith.constant 0 : index
    %c0_1 = arith.constant 0 : index
    %13 = vector.load %arg1[%c0, %c0_1] : memref<4x32xf32, #tpu.memory_space<vmem>>, vector<4x32xf32>
    %c0_2 = arith.constant 0 : index
    %c0_3 = arith.constant 0 : index
    %14 = vector.load %arg3[%c0_2, %c0_3] : memref<4x1xf32, #tpu.memory_space<vmem>>, vector<4x1xf32>
    %15 = vector.shape_cast %14 : vector<4x1xf32> to vector<4x1xf32>
    %16 = vector.broadcast %15 : vector<4x1xf32> to vector<4x32xf32>
    %c0_4 = arith.constant 0 : index
    %c0_5 = arith.constant 0 : index
    %17 = vector.load %arg5[%c0_4, %c0_5] : memref<4x1xf32, #tpu.memory_space<vmem>>, vector<4x1xf32>
    %18 = vector.shape_cast %17 : vector<4x1xf32> to vector<4x1xf32>
    %19 = vector.broadcast %18 : vector<4x1xf32> to vector<4x32xf32>
    %c0_6 = arith.constant 0 : index
    %c0_7 = arith.constant 0 : index
    %20 = vector.load %arg1[%c0_6, %c0_7] : memref<4x32xf32, #tpu.memory_space<vmem>>, vector<1x32xf32>
    %21 = vector.broadcast %20 : vector<1x32xf32> to vector<4x32xf32>
    %22 = arith.mulf %21, %13 : vector<4x32xf32>
    %c0_8 = arith.constant 0 : index
    %c0_9 = arith.constant 0 : index
    %23 = vector.load %arg13[%c0_8, %c0_9] : memref<16x32xf32, #tpu.memory_space<vmem>>, vector<4x32xf32>
    tpu.vector_store %arg13[%c0_8, %c0_9], %22 {strides = array<i32>} : memref<16x32xf32, #tpu.memory_space<vmem>>, vector<4x32xf32>,
    %c1 = arith.constant 1 : index
    %c0_10 = arith.constant 0 : index
    %24 = vector.load %arg1[%c1, %c0_10] : memref<4x32xf32, #tpu.memory_space<vmem>>, vector<1x32xf32>
    %25 = vector.broadcast %24 : vector<1x32xf32> to vector<4x32xf32>
    %26 = arith.mulf %25, %13 : vector<4x32xf32>
    %c4 = arith.constant 4 : index
    %c0_11 = arith.constant 0 : index
    %27 = vector.load %arg13[%c4, %c0_11] : memref<16x32xf32, #tpu.memory_space<vmem>>, vector<4x32xf32>
    tpu.vector_store %arg13[%c4, %c0_11], %26 {strides = array<i32>} : memref<16x32xf32, #tpu.memory_space<vmem>>, vector<4x32xf32>,
    %c2 = arith.constant 2 : index
    %c0_12 = arith.constant 0 : index
    %28 = vector.load %arg1[%c2, %c0_12] : memref<4x32xf32, #tpu.memory_space<vmem>>, vector<1x32xf32>
    %29 = vector.broadcast %28 : vector<1x32xf32> to vector<4x32xf32>
    %30 = arith.mulf %29, %13 : vector<4x32xf32>
    %c8 = arith.constant 8 : index
    %c0_13 = arith.constant 0 : index
    %31 = vector.load %arg13[%c8, %c0_13] : memref<16x32xf32, #tpu.memory_space<vmem>>, vector<4x32xf32>
    tpu.vector_store %arg13[%c8, %c0_13], %30 {strides = array<i32>} : memref<16x32xf32, #tpu.memory_space<vmem>>, vector<4x32xf32>,
    %c3 = arith.constant 3 : index
    %c0_14 = arith.constant 0 : index
    %32 = vector.load %arg1[%c3, %c0_14] : memref<4x32xf32, #tpu.memory_space<vmem>>, vector<1x32xf32>
    %33 = vector.broadcast %32 : vector<1x32xf32> to vector<4x32xf32>
    %34 = arith.mulf %33, %13 : vector<4x32xf32>
    %c12 = arith.constant 12 : index
    %c0_15 = arith.constant 0 : index
    %35 = vector.load %arg13[%c12, %c0_15] : memref<16x32xf32, #tpu.memory_space<vmem>>, vector<4x32xf32>
    tpu.vector_store %arg13[%c12, %c0_15], %34 {strides = array<i32>} : memref<16x32xf32, #tpu.memory_space<vmem>>, vector<4x32xf32>,
    %c0_16 = arith.constant 0 : index
    %c0_17 = arith.constant 0 : index
    %36 = vector.load %arg13[%c0_16, %c0_17] : memref<16x32xf32, #tpu.memory_space<vmem>>, vector<16x32xf32>
    %c0_18 = arith.constant 0 : index
    %c0_19 = arith.constant 0 : index
    %37 = vector.load %arg2[%c0_18, %c0_19] : memref<4x16xf32, #tpu.memory_space<vmem>>, vector<4x16xf32>
    %cst = arith.constant dense<0.000000e+00> : vector<4x32xf32>
    %38 = tpu.matmul %37, %36, %cst {dimension_numbers = #tpu.dot_dimension_numbers<[1], [0], [0], [1], [0, 0, 1, 1], [], []>} : vector<4x16xf32>, vector<16x32xf32>, vector<4x32xf32> -> vector<4x32xf32>
    %39 = arith.addf %16, %38 : vector<4x32xf32>
    %c0_20 = arith.constant 0 : index
    %c0_21 = arith.constant 0 : index
    %40 = vector.load %arg4[%c0_20, %c0_21] : memref<4x16xf32, #tpu.memory_space<vmem>>, vector<4x16xf32>
    %cst_22 = arith.constant dense<0.000000e+00> : vector<4x32xf32>
    %41 = tpu.matmul %40, %36, %cst_22 {dimension_numbers = #tpu.dot_dimension_numbers<[1], [0], [0], [1], [0, 0, 1, 1], [], []>} : vector<4x16xf32>, vector<16x32xf32>, vector<4x32xf32> -> vector<4x32xf32>
    %42 = arith.addf %19, %41 : vector<4x32xf32>
    %cst_23 = arith.constant 0.000000e+00 : f32
    %43 = vector.broadcast %cst_23 : f32 to vector<4x32xf32>
    %44 = arith.maximumf %39, %43 : vector<4x32xf32>
    %cst_24 = arith.constant 0.000000e+00 : f32
    %45 = vector.broadcast %cst_24 : f32 to vector<4x32xf32>
    %46 = arith.maximumf %42, %45 : vector<4x32xf32>
    %cst_25 = arith.constant dense<0.000000e+00> : vector<4x2xf32>
    %47 = tpu.matmul %44, %12, %cst_25 {dimension_numbers = #tpu.dot_dimension_numbers<[1], [0], [0], [1], [0, 0, 1, 1], [], []>} : vector<4x32xf32>, vector<32x2xf32>, vector<4x2xf32> -> vector<4x2xf32>
    %c0_26 = arith.constant 0 : index
    %c0_27 = arith.constant 0 : index
    %48 = vector.load %arg12[%c0_26, %c0_27] : memref<24x2xf32, #tpu.memory_space<vmem>>, vector<4x2xf32>
    tpu.vector_store %arg12[%c0_26, %c0_27], %47 {strides = array<i32>} : memref<24x2xf32, #tpu.memory_space<vmem>>, vector<4x2xf32>,
    %c0_28 = arith.constant 0 : index
    %c0_29 = arith.constant 0 : index
    %49 = vector.load %arg7[%c0_28, %c0_29] : memref<4x1xf32, #tpu.memory_space<vmem>>, vector<4x1xf32>
    %50 = vector.shape_cast %49 : vector<4x1xf32> to vector<4x1xf32>
    %51 = vector.broadcast %50 : vector<4x1xf32> to vector<4x32xf32>
    %c0_30 = arith.constant 0 : index
    %c0_31 = arith.constant 0 : index
    %52 = vector.load %arg9[%c0_30, %c0_31] : memref<4x1xf32, #tpu.memory_space<vmem>>, vector<4x1xf32>
    %53 = vector.shape_cast %52 : vector<4x1xf32> to vector<4x1xf32>
    %54 = vector.broadcast %53 : vector<4x1xf32> to vector<4x32xf32>
    %c0_32 = arith.constant 0 : index
    %c0_33 = arith.constant 0 : index
    %55 = vector.load %arg1[%c0_32, %c0_33] : memref<4x32xf32, #tpu.memory_space<vmem>>, vector<1x32xf32>
    %56 = vector.broadcast %55 : vector<1x32xf32> to vector<4x32xf32>
    %57 = arith.mulf %56, %46 : vector<4x32xf32>
    %c0_34 = arith.constant 0 : index
    %c0_35 = arith.constant 0 : index
    %58 = vector.load %arg13[%c0_34, %c0_35] : memref<16x32xf32, #tpu.memory_space<vmem>>, vector<4x32xf32>
    tpu.vector_store %arg13[%c0_34, %c0_35], %57 {strides = array<i32>} : memref<16x32xf32, #tpu.memory_space<vmem>>, vector<4x32xf32>,
    %c1_36 = arith.constant 1 : index
    %c0_37 = arith.constant 0 : index
    %59 = vector.load %arg1[%c1_36, %c0_37] : memref<4x32xf32, #tpu.memory_space<vmem>>, vector<1x32xf32>
    %60 = vector.broadcast %59 : vector<1x32xf32> to vector<4x32xf32>
    %61 = arith.mulf %60, %46 : vector<4x32xf32>
    %c4_38 = arith.constant 4 : index
    %c0_39 = arith.constant 0 : index
    %62 = vector.load %arg13[%c4_38, %c0_39] : memref<16x32xf32, #tpu.memory_space<vmem>>, vector<4x32xf32>
    tpu.vector_store %arg13[%c4_38, %c0_39], %61 {strides = array<i32>} : memref<16x32xf32, #tpu.memory_space<vmem>>, vector<4x32xf32>,
    %c2_40 = arith.constant 2 : index
    %c0_41 = arith.constant 0 : index
    %63 = vector.load %arg1[%c2_40, %c0_41] : memref<4x32xf32, #tpu.memory_space<vmem>>, vector<1x32xf32>
    %64 = vector.broadcast %63 : vector<1x32xf32> to vector<4x32xf32>
    %65 = arith.mulf %64, %46 : vector<4x32xf32>
    %c8_42 = arith.constant 8 : index
    %c0_43 = arith.constant 0 : index
    %66 = vector.load %arg13[%c8_42, %c0_43] : memref<16x32xf32, #tpu.memory_space<vmem>>, vector<4x32xf32>
    tpu.vector_store %arg13[%c8_42, %c0_43], %65 {strides = array<i32>} : memref<16x32xf32, #tpu.memory_space<vmem>>, vector<4x32xf32>,
    %c3_44 = arith.constant 3 : index
    %c0_45 = arith.constant 0 : index
    %67 = vector.load %arg1[%c3_44, %c0_45] : memref<4x32xf32, #tpu.memory_space<vmem>>, vector<1x32xf32>
    %68 = vector.broadcast %67 : vector<1x32xf32> to vector<4x32xf32>
    %69 = arith.mulf %68, %46 : vector<4x32xf32>
    %c12_46 = arith.constant 12 : index
    %c0_47 = arith.constant 0 : index
    %70 = vector.load %arg13[%c12_46, %c0_47] : memref<16x32xf32, #tpu.memory_space<vmem>>, vector<4x32xf32>
    tpu.vector_store %arg13[%c12_46, %c0_47], %69 {strides = array<i32>} : memref<16x32xf32, #tpu.memory_space<vmem>>, vector<4x32xf32>,
    %c0_48 = arith.constant 0 : index
    %c0_49 = arith.constant 0 : index
    %71 = vector.load %arg13[%c0_48, %c0_49] : memref<16x32xf32, #tpu.memory_space<vmem>>, vector<16x32xf32>
    %c0_50 = arith.constant 0 : index
    %c0_51 = arith.constant 0 : index
    %72 = vector.load %arg6[%c0_50, %c0_51] : memref<4x16xf32, #tpu.memory_space<vmem>>, vector<4x16xf32>
    %cst_52 = arith.constant dense<0.000000e+00> : vector<4x32xf32>
    %73 = tpu.matmul %72, %71, %cst_52 {dimension_numbers = #tpu.dot_dimension_numbers<[1], [0], [0], [1], [0, 0, 1, 1], [], []>} : vector<4x16xf32>, vector<16x32xf32>, vector<4x32xf32> -> vector<4x32xf32>
    %74 = arith.addf %51, %73 : vector<4x32xf32>
    %c0_53 = arith.constant 0 : index
    %c0_54 = arith.constant 0 : index
    %75 = vector.load %arg8[%c0_53, %c0_54] : memref<4x16xf32, #tpu.memory_space<vmem>>, vector<4x16xf32>
    %cst_55 = arith.constant dense<0.000000e+00> : vector<4x32xf32>
    %76 = tpu.matmul %75, %71, %cst_55 {dimension_numbers = #tpu.dot_dimension_numbers<[1], [0], [0], [1], [0, 0, 1, 1], [], []>} : vector<4x16xf32>, vector<16x32xf32>, vector<4x32xf32> -> vector<4x32xf32>
    %77 = arith.addf %54, %76 : vector<4x32xf32>
    %cst_56 = arith.constant 0.000000e+00 : f32
    %78 = vector.broadcast %cst_56 : f32 to vector<4x32xf32>
    %79 = arith.maximumf %74, %78 : vector<4x32xf32>
    %cst_57 = arith.constant 0.000000e+00 : f32
    %80 = vector.broadcast %cst_57 : f32 to vector<4x32xf32>
    %81 = arith.maximumf %77, %80 : vector<4x32xf32>
    %cst_58 = arith.constant dense<0.000000e+00> : vector<4x2xf32>
    %82 = tpu.matmul %79, %12, %cst_58 {dimension_numbers = #tpu.dot_dimension_numbers<[1], [0], [0], [1], [0, 0, 1, 1], [], []>} : vector<4x32xf32>, vector<32x2xf32>, vector<4x2xf32> -> vector<4x2xf32>
    %c8_59 = arith.constant 8 : index
    %c0_60 = arith.constant 0 : index
    %83 = vector.load %arg12[%c8_59, %c0_60] : memref<24x2xf32, #tpu.memory_space<vmem>>, vector<4x2xf32>
    tpu.vector_store %arg12[%c8_59, %c0_60], %82 {strides = array<i32>} : memref<24x2xf32, #tpu.memory_space<vmem>>, vector<4x2xf32>,
    %c0_61 = arith.constant 0 : index
    %c0_62 = arith.constant 0 : index
    %84 = vector.load %arg11[%c0_61, %c0_62] : memref<4x1xf32, #tpu.memory_space<vmem>>, vector<4x1xf32>
    %85 = vector.shape_cast %84 : vector<4x1xf32> to vector<4x1xf32>
    %86 = vector.broadcast %85 : vector<4x1xf32> to vector<4x32xf32>
    %c0_63 = arith.constant 0 : index
    %c0_64 = arith.constant 0 : index
    %87 = vector.load %arg1[%c0_63, %c0_64] : memref<4x32xf32, #tpu.memory_space<vmem>>, vector<1x32xf32>
    %88 = vector.broadcast %87 : vector<1x32xf32> to vector<4x32xf32>
    %89 = arith.mulf %88, %81 : vector<4x32xf32>
    %c0_65 = arith.constant 0 : index
    %c0_66 = arith.constant 0 : index
    %90 = vector.load %arg13[%c0_65, %c0_66] : memref<16x32xf32, #tpu.memory_space<vmem>>, vector<4x32xf32>
    tpu.vector_store %arg13[%c0_65, %c0_66], %89 {strides = array<i32>} : memref<16x32xf32, #tpu.memory_space<vmem>>, vector<4x32xf32>,
    %c1_67 = arith.constant 1 : index
    %c0_68 = arith.constant 0 : index
    %91 = vector.load %arg1[%c1_67, %c0_68] : memref<4x32xf32, #tpu.memory_space<vmem>>, vector<1x32xf32>
    %92 = vector.broadcast %91 : vector<1x32xf32> to vector<4x32xf32>
    %93 = arith.mulf %92, %81 : vector<4x32xf32>
    %c4_69 = arith.constant 4 : index
    %c0_70 = arith.constant 0 : index
    %94 = vector.load %arg13[%c4_69, %c0_70] : memref<16x32xf32, #tpu.memory_space<vmem>>, vector<4x32xf32>
    tpu.vector_store %arg13[%c4_69, %c0_70], %93 {strides = array<i32>} : memref<16x32xf32, #tpu.memory_space<vmem>>, vector<4x32xf32>,
    %c2_71 = arith.constant 2 : index
    %c0_72 = arith.constant 0 : index
    %95 = vector.load %arg1[%c2_71, %c0_72] : memref<4x32xf32, #tpu.memory_space<vmem>>, vector<1x32xf32>
    %96 = vector.broadcast %95 : vector<1x32xf32> to vector<4x32xf32>
    %97 = arith.mulf %96, %81 : vector<4x32xf32>
    %c8_73 = arith.constant 8 : index
    %c0_74 = arith.constant 0 : index
    %98 = vector.load %arg13[%c8_73, %c0_74] : memref<16x32xf32, #tpu.memory_space<vmem>>, vector<4x32xf32>
    tpu.vector_store %arg13[%c8_73, %c0_74], %97 {strides = array<i32>} : memref<16x32xf32, #tpu.memory_space<vmem>>, vector<4x32xf32>,
    %c3_75 = arith.constant 3 : index
    %c0_76 = arith.constant 0 : index
    %99 = vector.load %arg1[%c3_75, %c0_76] : memref<4x32xf32, #tpu.memory_space<vmem>>, vector<1x32xf32>
    %100 = vector.broadcast %99 : vector<1x32xf32> to vector<4x32xf32>
    %101 = arith.mulf %100, %81 : vector<4x32xf32>
    %c12_77 = arith.constant 12 : index
    %c0_78 = arith.constant 0 : index
    %102 = vector.load %arg13[%c12_77, %c0_78] : memref<16x32xf32, #tpu.memory_space<vmem>>, vector<4x32xf32>
    tpu.vector_store %arg13[%c12_77, %c0_78], %101 {strides = array<i32>} : memref<16x32xf32, #tpu.memory_space<vmem>>, vector<4x32xf32>,
    %c0_79 = arith.constant 0 : index
    %c0_80 = arith.constant 0 : index
    %103 = vector.load %arg13[%c0_79, %c0_80] : memref<16x32xf32, #tpu.memory_space<vmem>>, vector<16x32xf32>
    %c0_81 = arith.constant 0 : index
    %c0_82 = arith.constant 0 : index
    %104 = vector.load %arg10[%c0_81, %c0_82] : memref<4x16xf32, #tpu.memory_space<vmem>>, vector<4x16xf32>
    %cst_83 = arith.constant dense<0.000000e+00> : vector<4x32xf32>
    %105 = tpu.matmul %104, %103, %cst_83 {dimension_numbers = #tpu.dot_dimension_numbers<[1], [0], [0], [1], [0, 0, 1, 1], [], []>} : vector<4x16xf32>, vector<16x32xf32>, vector<4x32xf32> -> vector<4x32xf32>
    %106 = arith.addf %86, %105 : vector<4x32xf32>
    %cst_84 = arith.constant 0.000000e+00 : f32
    %107 = vector.broadcast %cst_84 : f32 to vector<4x32xf32>
    %108 = arith.maximumf %106, %107 : vector<4x32xf32>
    %cst_85 = arith.constant dense<0.000000e+00> : vector<4x2xf32>
    %109 = tpu.matmul %108, %12, %cst_85 {dimension_numbers = #tpu.dot_dimension_numbers<[1], [0], [0], [1], [0, 0, 1, 1], [], []>} : vector<4x32xf32>, vector<32x2xf32>, vector<4x2xf32> -> vector<4x2xf32>
    %c16 = arith.constant 16 : index
    %c0_86 = arith.constant 0 : index
    %110 = vector.load %arg12[%c16, %c0_86] : memref<24x2xf32, #tpu.memory_space<vmem>>, vector<4x2xf32>
    tpu.vector_store %arg12[%c16, %c0_86], %109 {strides = array<i32>} : memref<24x2xf32, #tpu.memory_space<vmem>>, vector<4x2xf32>,
    return
  }
  func.func @transform_0(%arg0: i32) -> (i32, i32) {
    %c0_i32 = arith.constant 0 : i32
    %c0_i32_0 = arith.constant 0 : i32
    return %c0_i32, %arg0 : i32, i32
  }
  func.func @transform_1(%arg0: i32) -> (i32, i32) {
    %c0_i32 = arith.constant 0 : i32
    %c0_i32_0 = arith.constant 0 : i32
    %c0_i32_1 = arith.constant 0 : i32
    return %c0_i32, %c0_i32_0 : i32, i32
  }
  func.func @transform_2(%arg0: i32) -> (i32, i32) {
    %c0_i32 = arith.constant 0 : i32
    %c0_i32_0 = arith.constant 0 : i32
    %c0_i32_1 = arith.constant 0 : i32
    return %c0_i32, %c0_i32_0 : i32, i32
  }
  func.func @transform_3(%arg0: i32) -> (i32, i32) {
    %c0_i32 = arith.constant 0 : i32
    %c0_i32_0 = arith.constant 0 : i32
    %c0_i32_1 = arith.constant 0 : i32
    return %c0_i32, %c0_i32_0 : i32, i32
  }
  func.func @transform_4(%arg0: i32) -> (i32, i32) {
    %c0_i32 = arith.constant 0 : i32
    %c0_i32_0 = arith.constant 0 : i32
    %c0_i32_1 = arith.constant 0 : i32
    return %c0_i32, %c0_i32_0 : i32, i32
  }
  func.func @transform_5(%arg0: i32) -> (i32, i32) {
    %c0_i32 = arith.constant 0 : i32
    %c0_i32_0 = arith.constant 0 : i32
    %c0_i32_1 = arith.constant 0 : i32
    return %c0_i32, %c0_i32_0 : i32, i32
  }
  func.func @transform_6(%arg0: i32) -> (i32, i32) {
    %c0_i32 = arith.constant 0 : i32
    %c0_i32_0 = arith.constant 0 : i32
    %c0_i32_1 = arith.constant 0 : i32
    return %c0_i32, %c0_i32_0 : i32, i32
  }
  func.func @transform_7(%arg0: i32) -> (i32, i32) {
    %c0_i32 = arith.constant 0 : i32
    %c0_i32_0 = arith.constant 0 : i32
    %c0_i32_1 = arith.constant 0 : i32
    return %c0_i32, %c0_i32_0 : i32, i32
  }
  func.func @transform_8(%arg0: i32) -> (i32, i32) {
    %c0_i32 = arith.constant 0 : i32
    %c0_i32_0 = arith.constant 0 : i32
    %c0_i32_1 = arith.constant 0 : i32
    return %c0_i32, %c0_i32_0 : i32, i32
  }
  func.func @transform_9(%arg0: i32) -> (i32, i32) {
    %c0_i32 = arith.constant 0 : i32
    %c0_i32_0 = arith.constant 0 : i32
    %c0_i32_1 = arith.constant 0 : i32
    return %c0_i32, %c0_i32_0 : i32, i32
  }
  func.func @transform_10(%arg0: i32) -> (i32, i32) {
    %c0_i32 = arith.constant 0 : i32
    %c0_i32_0 = arith.constant 0 : i32
    %c0_i32_1 = arith.constant 0 : i32
    return %c0_i32, %c0_i32_0 : i32, i32
  }
  func.func @transform_11(%arg0: i32) -> (i32, i32) {
    %c0_i32 = arith.constant 0 : i32
    %c0_i32_0 = arith.constant 0 : i32
    return %c0_i32, %arg0 : i32, i32
  }
}

module attributes {stable_mosaic.version = 11 : i64} {
  func.func @kernel(%arg0: i32, %arg1: memref<4x32xf32, #tpu.memory_space<vmem>>, %arg2: memref<4x16xf32, #tpu.memory_space<vmem>>, %arg3: memref<4x1xf32, #tpu.memory_space<vmem>>, %arg4: memref<4x16xf32, #tpu.memory_space<vmem>>, %arg5: memref<4x1xf32, #tpu.memory_space<vmem>>, %arg6: memref<4x16xf32, #tpu.memory_space<vmem>>, %arg7: memref<4x1xf32, #tpu.memory_space<vmem>>, %arg8: memref<4x16xf32, #tpu.memory_space<vmem>>, %arg9: memref<4x1xf32, #tpu.memory_space<vmem>>, %arg10: memref<4x16xf32, #tpu.memory_space<vmem>>, %arg11: memref<4x1xf32, #tpu.memory_space<vmem>>, %arg12: memref<24x2xf32, #tpu.memory_space<vmem>>, %arg13: memref<16x32xf32, #tpu.memory_space<vmem>>) attributes {dimension_semantics = [#tpu.dimension_semantics<parallel>], iteration_bounds = array<i64: 1>, scalar_prefetch = 0 : i64, scratch_operands = 1 : i64, tpu.core_type = #tpu.core_type<tc>, window_params = [{transform_indices = @transform_0, window_bounds = array<i64: 4, 32>}, {pipeline_mode = #tpu.pipeline_mode<synchronous>, transform_indices = @transform_1, window_bounds = array<i64: 4, 16>}, {pipeline_mode = #tpu.pipeline_mode<synchronous>, transform_indices = @transform_2, window_bounds = array<i64: 4, 1>}, {pipeline_mode = #tpu.pipeline_mode<synchronous>, transform_indices = @transform_3, window_bounds = array<i64: 4, 16>}, {pipeline_mode = #tpu.pipeline_mode<synchronous>, transform_indices = @transform_4, window_bounds = array<i64: 4, 1>}, {pipeline_mode = #tpu.pipeline_mode<synchronous>, transform_indices = @transform_5, window_bounds = array<i64: 4, 16>}, {pipeline_mode = #tpu.pipeline_mode<synchronous>, transform_indices = @transform_6, window_bounds = array<i64: 4, 1>}, {pipeline_mode = #tpu.pipeline_mode<synchronous>, transform_indices = @transform_7, window_bounds = array<i64: 4, 16>}, {pipeline_mode = #tpu.pipeline_mode<synchronous>, transform_indices = @transform_8, window_bounds = array<i64: 4, 1>}, {pipeline_mode = #tpu.pipeline_mode<synchronous>, transform_indices = @transform_9, window_bounds = array<i64: 4, 16>}, {pipeline_mode = #tpu.pipeline_mode<synchronous>, transform_indices = @transform_10, window_bounds = array<i64: 4, 1>}, {transform_indices = @transform_11, window_bounds = array<i64: 24, 2>}]} {
    %0 = tpu.iota {dimensions = array<i32: 0>} : vector<32x2xi32>
    %1 = tpu.iota {dimensions = array<i32: 1>} : vector<32x2xi32>
    %c16_i32 = arith.constant 16 : i32
    %2 = vector.broadcast %c16_i32 : i32 to vector<32x2xi32>
    %3 = arith.muli %1, %2 : vector<32x2xi32>
    %4 = arith.cmpi sge, %0, %3 : vector<32x2xi32>
    %c1_i32 = arith.constant 1 : i32
    %5 = vector.broadcast %c1_i32 : i32 to vector<32x2xi32>
    %6 = arith.addi %1, %5 : vector<32x2xi32>
    %c16_i32_0 = arith.constant 16 : i32
    %7 = vector.broadcast %c16_i32_0 : i32 to vector<32x2xi32>
    %8 = arith.muli %6, %7 : vector<32x2xi32>
    %9 = arith.cmpi slt, %0, %8 : vector<32x2xi32>
    %10 = arith.andi %4, %9 : vector<32x2xi1>
    %11 = arith.extui %10 : vector<32x2xi1> to vector<32x2xi32>
    %12 = arith.sitofp %11 : vector<32x2xi32> to vector<32x2xf32>
    %c0 = arith.constant 0 : index
    %c0_1 = arith.constant 0 : index
    %13 = vector.load %arg1[%c0, %c0_1] : memref<4x32xf32, #tpu.memory_space<vmem>>, vector<4x32xf32>
    %c0_2 = arith.constant 0 : index
    %c0_3 = arith.constant 0 : index
    %14 = vector.load %arg3[%c0_2, %c0_3] : memref<4x1xf32, #tpu.memory_space<vmem>>, vector<4x1xf32>
    %15 = vector.shape_cast %14 : vector<4x1xf32> to vector<4x1xf32>
    %16 = vector.broadcast %15 : vector<4x1xf32> to vector<4x32xf32>
    %c0_4 = arith.constant 0 : index
    %c0_5 = arith.constant 0 : index
    %17 = vector.load %arg5[%c0_4, %c0_5] : memref<4x1xf32, #tpu.memory_space<vmem>>, vector<4x1xf32>
    %18 = vector.shape_cast %17 : vector<4x1xf32> to vector<4x1xf32>
    %19 = vector.broadcast %18 : vector<4x1xf32> to vector<4x32xf32>
    %c0_6 = arith.constant 0 : index
    %c0_7 = arith.constant 0 : index
    %20 = vector.load %arg1[%c0_6, %c0_7] : memref<4x32xf32, #tpu.memory_space<vmem>>, vector<1x32xf32>
    %21 = vector.broadcast %20 : vector<1x32xf32> to vector<4x32xf32>
    %22 = arith.mulf %21, %13 : vector<4x32xf32>
    %c0_8 = arith.constant 0 : index
    %c0_9 = arith.constant 0 : index
    %23 = vector.load %arg13[%c0_8, %c0_9] : memref<16x32xf32, #tpu.memory_space<vmem>>, vector<4x32xf32>
    tpu.vector_store %arg13[%c0_8, %c0_9], %22 {strides = array<i32>} : memref<16x32xf32, #tpu.memory_space<vmem>>, vector<4x32xf32>,
    %c1 = arith.constant 1 : index
    %c0_10 = arith.constant 0 : index
    %24 = vector.load %arg1[%c1, %c0_10] : memref<4x32xf32, #tpu.memory_space<vmem>>, vector<1x32xf32>
    %25 = vector.broadcast %24 : vector<1x32xf32> to vector<4x32xf32>
    %26 = arith.mulf %25, %13 : vector<4x32xf32>
    %c4 = arith.constant 4 : index
    %c0_11 = arith.constant 0 : index
    %27 = vector.load %arg13[%c4, %c0_11] : memref<16x32xf32, #tpu.memory_space<vmem>>, vector<4x32xf32>
    tpu.vector_store %arg13[%c4, %c0_11], %26 {strides = array<i32>} : memref<16x32xf32, #tpu.memory_space<vmem>>, vector<4x32xf32>,
    %c2 = arith.constant 2 : index
    %c0_12 = arith.constant 0 : index
    %28 = vector.load %arg1[%c2, %c0_12] : memref<4x32xf32, #tpu.memory_space<vmem>>, vector<1x32xf32>
    %29 = vector.broadcast %28 : vector<1x32xf32> to vector<4x32xf32>
    %30 = arith.mulf %29, %13 : vector<4x32xf32>
    %c8 = arith.constant 8 : index
    %c0_13 = arith.constant 0 : index
    %31 = vector.load %arg13[%c8, %c0_13] : memref<16x32xf32, #tpu.memory_space<vmem>>, vector<4x32xf32>
    tpu.vector_store %arg13[%c8, %c0_13], %30 {strides = array<i32>} : memref<16x32xf32, #tpu.memory_space<vmem>>, vector<4x32xf32>,
    %c3 = arith.constant 3 : index
    %c0_14 = arith.constant 0 : index
    %32 = vector.load %arg1[%c3, %c0_14] : memref<4x32xf32, #tpu.memory_space<vmem>>, vector<1x32xf32>
    %33 = vector.broadcast %32 : vector<1x32xf32> to vector<4x32xf32>
    %34 = arith.mulf %33, %13 : vector<4x32xf32>
    %c12 = arith.constant 12 : index
    %c0_15 = arith.constant 0 : index
    %35 = vector.load %arg13[%c12, %c0_15] : memref<16x32xf32, #tpu.memory_space<vmem>>, vector<4x32xf32>
    tpu.vector_store %arg13[%c12, %c0_15], %34 {strides = array<i32>} : memref<16x32xf32, #tpu.memory_space<vmem>>, vector<4x32xf32>,
    %c0_16 = arith.constant 0 : index
    %c0_17 = arith.constant 0 : index
    %36 = vector.load %arg13[%c0_16, %c0_17] : memref<16x32xf32, #tpu.memory_space<vmem>>, vector<16x32xf32>
    %c0_18 = arith.constant 0 : index
    %c0_19 = arith.constant 0 : index
    %37 = vector.load %arg2[%c0_18, %c0_19] : memref<4x16xf32, #tpu.memory_space<vmem>>, vector<4x16xf32>
    %cst = arith.constant dense<0.000000e+00> : vector<4x32xf32>
    %38 = tpu.matmul %37, %36, %cst {dimension_numbers = #tpu.dot_dimension_numbers<[1], [0], [0], [1], [0, 0, 1, 1], [], []>} : vector<4x16xf32>, vector<16x32xf32>, vector<4x32xf32> -> vector<4x32xf32>
    %39 = arith.addf %16, %38 : vector<4x32xf32>
    %c0_20 = arith.constant 0 : index
    %c0_21 = arith.constant 0 : index
    %40 = vector.load %arg4[%c0_20, %c0_21] : memref<4x16xf32, #tpu.memory_space<vmem>>, vector<4x16xf32>
    %cst_22 = arith.constant dense<0.000000e+00> : vector<4x32xf32>
    %41 = tpu.matmul %40, %36, %cst_22 {dimension_numbers = #tpu.dot_dimension_numbers<[1], [0], [0], [1], [0, 0, 1, 1], [], []>} : vector<4x16xf32>, vector<16x32xf32>, vector<4x32xf32> -> vector<4x32xf32>
    %42 = arith.addf %19, %41 : vector<4x32xf32>
    %cst_23 = arith.constant 0.000000e+00 : f32
    %43 = vector.broadcast %cst_23 : f32 to vector<4x32xf32>
    %44 = arith.maximumf %39, %43 : vector<4x32xf32>
    %cst_24 = arith.constant 0.000000e+00 : f32
    %45 = vector.broadcast %cst_24 : f32 to vector<4x32xf32>
    %46 = arith.maximumf %42, %45 : vector<4x32xf32>
    %cst_25 = arith.constant dense<0.000000e+00> : vector<4x2xf32>
    %47 = tpu.matmul %44, %12, %cst_25 {dimension_numbers = #tpu.dot_dimension_numbers<[1], [0], [0], [1], [0, 0, 1, 1], [], []>} : vector<4x32xf32>, vector<32x2xf32>, vector<4x2xf32> -> vector<4x2xf32>
    %c0_26 = arith.constant 0 : index
    %c0_27 = arith.constant 0 : index
    %48 = vector.load %arg12[%c0_26, %c0_27] : memref<24x2xf32, #tpu.memory_space<vmem>>, vector<4x2xf32>
    tpu.vector_store %arg12[%c0_26, %c0_27], %47 {strides = array<i32>} : memref<24x2xf32, #tpu.memory_space<vmem>>, vector<4x2xf32>,
    %c0_28 = arith.constant 0 : index
    %c0_29 = arith.constant 0 : index
    %49 = vector.load %arg7[%c0_28, %c0_29] : memref<4x1xf32, #tpu.memory_space<vmem>>, vector<4x1xf32>
    %50 = vector.shape_cast %49 : vector<4x1xf32> to vector<4x1xf32>
    %51 = vector.broadcast %50 : vector<4x1xf32> to vector<4x32xf32>
    %c0_30 = arith.constant 0 : index
    %c0_31 = arith.constant 0 : index
    %52 = vector.load %arg9[%c0_30, %c0_31] : memref<4x1xf32, #tpu.memory_space<vmem>>, vector<4x1xf32>
    %53 = vector.shape_cast %52 : vector<4x1xf32> to vector<4x1xf32>
    %54 = vector.broadcast %53 : vector<4x1xf32> to vector<4x32xf32>
    %c0_32 = arith.constant 0 : index
    %c0_33 = arith.constant 0 : index
    %55 = vector.load %arg1[%c0_32, %c0_33] : memref<4x32xf32, #tpu.memory_space<vmem>>, vector<1x32xf32>
    %56 = vector.broadcast %55 : vector<1x32xf32> to vector<4x32xf32>
    %57 = arith.mulf %56, %46 : vector<4x32xf32>
    %c0_34 = arith.constant 0 : index
    %c0_35 = arith.constant 0 : index
    %58 = vector.load %arg13[%c0_34, %c0_35] : memref<16x32xf32, #tpu.memory_space<vmem>>, vector<4x32xf32>
    tpu.vector_store %arg13[%c0_34, %c0_35], %57 {strides = array<i32>} : memref<16x32xf32, #tpu.memory_space<vmem>>, vector<4x32xf32>,
    %c1_36 = arith.constant 1 : index
    %c0_37 = arith.constant 0 : index
    %59 = vector.load %arg1[%c1_36, %c0_37] : memref<4x32xf32, #tpu.memory_space<vmem>>, vector<1x32xf32>
    %60 = vector.broadcast %59 : vector<1x32xf32> to vector<4x32xf32>
    %61 = arith.mulf %60, %46 : vector<4x32xf32>
    %c4_38 = arith.constant 4 : index
    %c0_39 = arith.constant 0 : index
    %62 = vector.load %arg13[%c4_38, %c0_39] : memref<16x32xf32, #tpu.memory_space<vmem>>, vector<4x32xf32>
    tpu.vector_store %arg13[%c4_38, %c0_39], %61 {strides = array<i32>} : memref<16x32xf32, #tpu.memory_space<vmem>>, vector<4x32xf32>,
    %c2_40 = arith.constant 2 : index
    %c0_41 = arith.constant 0 : index
    %63 = vector.load %arg1[%c2_40, %c0_41] : memref<4x32xf32, #tpu.memory_space<vmem>>, vector<1x32xf32>
    %64 = vector.broadcast %63 : vector<1x32xf32> to vector<4x32xf32>
    %65 = arith.mulf %64, %46 : vector<4x32xf32>
    %c8_42 = arith.constant 8 : index
    %c0_43 = arith.constant 0 : index
    %66 = vector.load %arg13[%c8_42, %c0_43] : memref<16x32xf32, #tpu.memory_space<vmem>>, vector<4x32xf32>
    tpu.vector_store %arg13[%c8_42, %c0_43], %65 {strides = array<i32>} : memref<16x32xf32, #tpu.memory_space<vmem>>, vector<4x32xf32>,
    %c3_44 = arith.constant 3 : index
    %c0_45 = arith.constant 0 : index
    %67 = vector.load %arg1[%c3_44, %c0_45] : memref<4x32xf32, #tpu.memory_space<vmem>>, vector<1x32xf32>
    %68 = vector.broadcast %67 : vector<1x32xf32> to vector<4x32xf32>
    %69 = arith.mulf %68, %46 : vector<4x32xf32>
    %c12_46 = arith.constant 12 : index
    %c0_47 = arith.constant 0 : index
    %70 = vector.load %arg13[%c12_46, %c0_47] : memref<16x32xf32, #tpu.memory_space<vmem>>, vector<4x32xf32>
    tpu.vector_store %arg13[%c12_46, %c0_47], %69 {strides = array<i32>} : memref<16x32xf32, #tpu.memory_space<vmem>>, vector<4x32xf32>,
    %c0_48 = arith.constant 0 : index
    %c0_49 = arith.constant 0 : index
    %71 = vector.load %arg13[%c0_48, %c0_49] : memref<16x32xf32, #tpu.memory_space<vmem>>, vector<16x32xf32>
    %c0_50 = arith.constant 0 : index
    %c0_51 = arith.constant 0 : index
    %72 = vector.load %arg6[%c0_50, %c0_51] : memref<4x16xf32, #tpu.memory_space<vmem>>, vector<4x16xf32>
    %cst_52 = arith.constant dense<0.000000e+00> : vector<4x32xf32>
    %73 = tpu.matmul %72, %71, %cst_52 {dimension_numbers = #tpu.dot_dimension_numbers<[1], [0], [0], [1], [0, 0, 1, 1], [], []>} : vector<4x16xf32>, vector<16x32xf32>, vector<4x32xf32> -> vector<4x32xf32>
    %74 = arith.addf %51, %73 : vector<4x32xf32>
    %c0_53 = arith.constant 0 : index
    %c0_54 = arith.constant 0 : index
    %75 = vector.load %arg8[%c0_53, %c0_54] : memref<4x16xf32, #tpu.memory_space<vmem>>, vector<4x16xf32>
    %cst_55 = arith.constant dense<0.000000e+00> : vector<4x32xf32>
    %76 = tpu.matmul %75, %71, %cst_55 {dimension_numbers = #tpu.dot_dimension_numbers<[1], [0], [0], [1], [0, 0, 1, 1], [], []>} : vector<4x16xf32>, vector<16x32xf32>, vector<4x32xf32> -> vector<4x32xf32>
    %77 = arith.addf %54, %76 : vector<4x32xf32>
    %cst_56 = arith.constant 0.000000e+00 : f32
    %78 = vector.broadcast %cst_56 : f32 to vector<4x32xf32>
    %79 = arith.maximumf %74, %78 : vector<4x32xf32>
    %cst_57 = arith.constant 0.000000e+00 : f32
    %80 = vector.broadcast %cst_57 : f32 to vector<4x32xf32>
    %81 = arith.maximumf %77, %80 : vector<4x32xf32>
    %cst_58 = arith.constant dense<0.000000e+00> : vector<4x2xf32>
    %82 = tpu.matmul %79, %12, %cst_58 {dimension_numbers = #tpu.dot_dimension_numbers<[1], [0], [0], [1], [0, 0, 1, 1], [], []>} : vector<4x32xf32>, vector<32x2xf32>, vector<4x2xf32> -> vector<4x2xf32>
    %c8_59 = arith.constant 8 : index
    %c0_60 = arith.constant 0 : index
    %83 = vector.load %arg12[%c8_59, %c0_60] : memref<24x2xf32, #tpu.memory_space<vmem>>, vector<4x2xf32>
    tpu.vector_store %arg12[%c8_59, %c0_60], %82 {strides = array<i32>} : memref<24x2xf32, #tpu.memory_space<vmem>>, vector<4x2xf32>,
    %c0_61 = arith.constant 0 : index
    %c0_62 = arith.constant 0 : index
    %84 = vector.load %arg11[%c0_61, %c0_62] : memref<4x1xf32, #tpu.memory_space<vmem>>, vector<4x1xf32>
    %85 = vector.shape_cast %84 : vector<4x1xf32> to vector<4x1xf32>
    %86 = vector.broadcast %85 : vector<4x1xf32> to vector<4x32xf32>
    %c0_63 = arith.constant 0 : index
    %c0_64 = arith.constant 0 : index
    %87 = vector.load %arg1[%c0_63, %c0_64] : memref<4x32xf32, #tpu.memory_space<vmem>>, vector<1x32xf32>
    %88 = vector.broadcast %87 : vector<1x32xf32> to vector<4x32xf32>
    %89 = arith.mulf %88, %81 : vector<4x32xf32>
    %c0_65 = arith.constant 0 : index
    %c0_66 = arith.constant 0 : index
    %90 = vector.load %arg13[%c0_65, %c0_66] : memref<16x32xf32, #tpu.memory_space<vmem>>, vector<4x32xf32>
    tpu.vector_store %arg13[%c0_65, %c0_66], %89 {strides = array<i32>} : memref<16x32xf32, #tpu.memory_space<vmem>>, vector<4x32xf32>,
    %c1_67 = arith.constant 1 : index
    %c0_68 = arith.constant 0 : index
    %91 = vector.load %arg1[%c1_67, %c0_68] : memref<4x32xf32, #tpu.memory_space<vmem>>, vector<1x32xf32>
    %92 = vector.broadcast %91 : vector<1x32xf32> to vector<4x32xf32>
    %93 = arith.mulf %92, %81 : vector<4x32xf32>
    %c4_69 = arith.constant 4 : index
    %c0_70 = arith.constant 0 : index
    %94 = vector.load %arg13[%c4_69, %c0_70] : memref<16x32xf32, #tpu.memory_space<vmem>>, vector<4x32xf32>
    tpu.vector_store %arg13[%c4_69, %c0_70], %93 {strides = array<i32>} : memref<16x32xf32, #tpu.memory_space<vmem>>, vector<4x32xf32>,
    %c2_71 = arith.constant 2 : index
    %c0_72 = arith.constant 0 : index
    %95 = vector.load %arg1[%c2_71, %c0_72] : memref<4x32xf32, #tpu.memory_space<vmem>>, vector<1x32xf32>
    %96 = vector.broadcast %95 : vector<1x32xf32> to vector<4x32xf32>
    %97 = arith.mulf %96, %81 : vector<4x32xf32>
    %c8_73 = arith.constant 8 : index
    %c0_74 = arith.constant 0 : index
    %98 = vector.load %arg13[%c8_73, %c0_74] : memref<16x32xf32, #tpu.memory_space<vmem>>, vector<4x32xf32>
    tpu.vector_store %arg13[%c8_73, %c0_74], %97 {strides = array<i32>} : memref<16x32xf32, #tpu.memory_space<vmem>>, vector<4x32xf32>,
    %c3_75 = arith.constant 3 : index
    %c0_76 = arith.constant 0 : index
    %99 = vector.load %arg1[%c3_75, %c0_76] : memref<4x32xf32, #tpu.memory_space<vmem>>, vector<1x32xf32>
    %100 = vector.broadcast %99 : vector<1x32xf32> to vector<4x32xf32>
    %101 = arith.mulf %100, %81 : vector<4x32xf32>
    %c12_77 = arith.constant 12 : index
    %c0_78 = arith.constant 0 : index
    %102 = vector.load %arg13[%c12_77, %c0_78] : memref<16x32xf32, #tpu.memory_space<vmem>>, vector<4x32xf32>
    tpu.vector_store %arg13[%c12_77, %c0_78], %101 {strides = array<i32>} : memref<16x32xf32, #tpu.memory_space<vmem>>, vector<4x32xf32>,
    %c0_79 = arith.constant 0 : index
    %c0_80 = arith.constant 0 : index
    %103 = vector.load %arg13[%c0_79, %c0_80] : memref<16x32xf32, #tpu.memory_space<vmem>>, vector<16x32xf32>
    %c0_81 = arith.constant 0 : index
    %c0_82 = arith.constant 0 : index
    %104 = vector.load %arg10[%c0_81, %c0_82] : memref<4x16xf32, #tpu.memory_space<vmem>>, vector<4x16xf32>
    %cst_83 = arith.constant dense<0.000000e+00> : vector<4x32xf32>
    %105 = tpu.matmul %104, %103, %cst_83 {dimension_numbers = #tpu.dot_dimension_numbers<[1], [0], [0], [1], [0, 0, 1, 1], [], []>} : vector<4x16xf32>, vector<16x32xf32>, vector<4x32xf32> -> vector<4x32xf32>
    %106 = arith.addf %86, %105 : vector<4x32xf32>
    %cst_84 = arith.constant 0.000000e+00 : f32
    %107 = vector.broadcast %cst_84 : f32 to vector<4x32xf32>
    %108 = arith.maximumf %106, %107 : vector<4x32xf32>
    %cst_85 = arith.constant dense<0.000000e+00> : vector<4x2xf32>
    %109 = tpu.matmul %108, %12, %cst_85 {dimension_numbers = #tpu.dot_dimension_numbers<[1], [0], [0], [1], [0, 0, 1, 1], [], []>} : vector<4x32xf32>, vector<32x2xf32>, vector<4x2xf32> -> vector<4x2xf32>
    %c16 = arith.constant 16 : index
    %c0_86 = arith.constant 0 : index
    %110 = vector.load %arg12[%c16, %c0_86] : memref<24x2xf32, #tpu.memory_space<vmem>>, vector<4x2xf32>
    tpu.vector_store %arg12[%c16, %c0_86], %109 {strides = array<i32>} : memref<24x2xf32, #tpu.memory_space<vmem>>, vector<4x2xf32>,
    return
  }
  func.func @transform_0(%arg0: i32) -> (i32, i32) {
    %c0_i32 = arith.constant 0 : i32
    %c0_i32_0 = arith.constant 0 : i32
    return %c0_i32, %arg0 : i32, i32
  }
  func.func @transform_1(%arg0: i32) -> (i32, i32) {
    %c0_i32 = arith.constant 0 : i32
    %c0_i32_0 = arith.constant 0 : i32
    %c0_i32_1 = arith.constant 0 : i32
    return %c0_i32, %c0_i32_0 : i32, i32
  }
  func.func @transform_2(%arg0: i32) -> (i32, i32) {
    %c0_i32 = arith.constant 0 : i32
    %c0_i32_0 = arith.constant 0 : i32
    %c0_i32_1 = arith.constant 0 : i32
    return %c0_i32, %c0_i32_0 : i32, i32
  }
  func.func @transform_3(%arg0: i32) -> (i32, i32) {
    %c0_i32 = arith.constant 0 : i32
    %c0_i32_0 = arith.constant 0 : i32
    %c0_i32_1 = arith.constant 0 : i32
    return %c0_i32, %c0_i32_0 : i32, i32
  }
  func.func @transform_4(%arg0: i32) -> (i32, i32) {
    %c0_i32 = arith.constant 0 : i32
    %c0_i32_0 = arith.constant 0 : i32
    %c0_i32_1 = arith.constant 0 : i32
    return %c0_i32, %c0_i32_0 : i32, i32
  }
  func.func @transform_5(%arg0: i32) -> (i32, i32) {
    %c0_i32 = arith.constant 0 : i32
    %c0_i32_0 = arith.constant 0 : i32
    %c0_i32_1 = arith.constant 0 : i32
    return %c0_i32, %c0_i32_0 : i32, i32
  }
  func.func @transform_6(%arg0: i32) -> (i32, i32) {
    %c0_i32 = arith.constant 0 : i32
    %c0_i32_0 = arith.constant 0 : i32
    %c0_i32_1 = arith.constant 0 : i32
    return %c0_i32, %c0_i32_0 : i32, i32
  }
  func.func @transform_7(%arg0: i32) -> (i32, i32) {
    %c0_i32 = arith.constant 0 : i32
    %c0_i32_0 = arith.constant 0 : i32
    %c0_i32_1 = arith.constant 0 : i32
    return %c0_i32, %c0_i32_0 : i32, i32
  }
  func.func @transform_8(%arg0: i32) -> (i32, i32) {
    %c0_i32 = arith.constant 0 : i32
    %c0_i32_0 = arith.constant 0 : i32
    %c0_i32_1 = arith.constant 0 : i32
    return %c0_i32, %c0_i32_0 : i32, i32
  }
  func.func @transform_9(%arg0: i32) -> (i32, i32) {
    %c0_i32 = arith.constant 0 : i32
    %c0_i32_0 = arith.constant 0 : i32
    %c0_i32_1 = arith.constant 0 : i32
    return %c0_i32, %c0_i32_0 : i32, i32
  }
  func.func @transform_10(%arg0: i32) -> (i32, i32) {
    %c0_i32 = arith.constant 0 : i32
    %c0_i32_0 = arith.constant 0 : i32
    %c0_i32_1 = arith.constant 0 : i32
    return %c0_i32, %c0_i32_0 : i32, i32
  }
  func.func @transform_11(%arg0: i32) -> (i32, i32) {
    %c0_i32 = arith.constant 0 : i32
    %c0_i32_0 = arith.constant 0 : i32
    return %c0_i32, %arg0 : i32, i32
  }
}

</mosaic_0001>

<llo_original>
// kernel: tpu_custom_call.1
$region0: #{tpu_custom_call.1}
  #allocation0 [shape = 'u32[]', space=smem, size = 0x4, offset = 0x4, fixed_abs, tag = 'smem constant byte address 0x4 - core index']
  #allocation1 [shape = 'u32[144,128]{1,0:T(1,128)}', space=vmem, size = 0x12000, scoped, tag = 'internal scratch']
  #allocation2 [shape = 'f32[16,32]{1,0:T(8,128)}', space=vmem, size = 0x2000, scoped, tag = 'scratch operand']
  %s0 = inlined_call_operand.vmem [shape: f32[4,32], index: 0, kind: input, shape index: {}]
  %s1 = inlined_call_operand.vmem [shape: f32[4,16], index: 1, kind: input, shape index: {}]
  %s2 = inlined_call_operand.vmem [shape: f32[4,1], index: 2, kind: input, shape index: {}]
  %s3 = inlined_call_operand.vmem [shape: f32[4,16], index: 3, kind: input, shape index: {}]
  %s4 = inlined_call_operand.vmem [shape: f32[4,1], index: 4, kind: input, shape index: {}]
  %s5 = inlined_call_operand.vmem [shape: f32[4,16], index: 5, kind: input, shape index: {}]
  %s6 = inlined_call_operand.vmem [shape: f32[4,1], index: 6, kind: input, shape index: {}]
  %s7 = inlined_call_operand.vmem [shape: f32[4,16], index: 7, kind: input, shape index: {}]
  %s8 = inlined_call_operand.vmem [shape: f32[4,1], index: 8, kind: input, shape index: {}]
  %s9 = inlined_call_operand.vmem [shape: f32[4,16], index: 9, kind: input, shape index: {}]
  %s10 = inlined_call_operand.vmem [shape: f32[4,1], index: 10, kind: input, shape index: {}]
  %s11 = inlined_call_operand.vmem [shape: f32[24,2], index: 11, kind: output, shape index: {}]
  %s12 = sld [smem:[#allocation0]]
  $region54: #{tpu_custom_call.1} parent=0
    _
  %s14 = ssub.s32 1, %s12
  %s15 = scalar_select 0, %s14, %s12
  // Predicated region
  $region2: #{tpu_custom_call.1} parent=0 // pred_check
    _
  $region3: #{tpu_custom_call.1} parent=0 // pred_check_branch
    %17 = sbr.rel (0) target = $region5
  $region4: #{tpu_custom_call.1} parent=0 // pred_region
    _
  $region5: #{tpu_custom_call.1} parent=0 // pred_fallthru
    _
  // Predicated region
  $region6: #{tpu_custom_call.1} parent=0 // pred_check
    _
  $region7: #{tpu_custom_call.1} parent=0 // pred_check_branch
    %19 = sbr.rel (0) target = $region9
  $region8: #{tpu_custom_call.1} parent=0 // pred_region
    _
  $region9: #{tpu_custom_call.1} parent=0 // pred_fallthru
    _
  // Predicated region
  $region10: #{tpu_custom_call.1} parent=0 // pred_check
    _
  $region11: #{tpu_custom_call.1} parent=0 // pred_check_branch
    %21 = sbr.rel (0) target = $region13
  $region12: #{tpu_custom_call.1} parent=0 // pred_region
    _
  $region13: #{tpu_custom_call.1} parent=0 // pred_fallthru
    _
  // Predicated region
  $region14: #{tpu_custom_call.1} parent=0 // pred_check
    _
  $region15: #{tpu_custom_call.1} parent=0 // pred_check_branch
    %23 = sbr.rel (0) target = $region17
  $region16: #{tpu_custom_call.1} parent=0 // pred_region
    _
  $region17: #{tpu_custom_call.1} parent=0 // pred_fallthru
    _
  // Predicated region
  $region18: #{tpu_custom_call.1} parent=0 // pred_check
    _
  $region19: #{tpu_custom_call.1} parent=0 // pred_check_branch
    %25 = sbr.rel (0) target = $region21
  $region20: #{tpu_custom_call.1} parent=0 // pred_region
    _
  $region21: #{tpu_custom_call.1} parent=0 // pred_fallthru
    _
  // Predicated region
  $region22: #{tpu_custom_call.1} parent=0 // pred_check
    _
  $region23: #{tpu_custom_call.1} parent=0 // pred_check_branch
    %27 = sbr.rel (0) target = $region25
  $region24: #{tpu_custom_call.1} parent=0 // pred_region
    _
  $region25: #{tpu_custom_call.1} parent=0 // pred_fallthru
    _
  // Predicated region
  $region26: #{tpu_custom_call.1} parent=0 // pred_check
    _
  $region27: #{tpu_custom_call.1} parent=0 // pred_check_branch
    %29 = sbr.rel (0) target = $region29
  $region28: #{tpu_custom_call.1} parent=0 // pred_region
    _
  $region29: #{tpu_custom_call.1} parent=0 // pred_fallthru
    _
  // Predicated region
  $region30: #{tpu_custom_call.1} parent=0 // pred_check
    _
  $region31: #{tpu_custom_call.1} parent=0 // pred_check_branch
    %31 = sbr.rel (0) target = $region33
  $region32: #{tpu_custom_call.1} parent=0 // pred_region
    _
  $region33: #{tpu_custom_call.1} parent=0 // pred_fallthru
    _
  // Predicated region
  $region34: #{tpu_custom_call.1} parent=0 // pred_check
    _
  $region35: #{tpu_custom_call.1} parent=0 // pred_check_branch
    %33 = sbr.rel (0) target = $region37
  $region36: #{tpu_custom_call.1} parent=0 // pred_region
    _
  $region37: #{tpu_custom_call.1} parent=0 // pred_fallthru
    _
  // Predicated region
  $region38: #{tpu_custom_call.1} parent=0 // pred_check
    _
  $region39: #{tpu_custom_call.1} parent=0 // pred_check_branch
    %35 = sbr.rel (0) target = $region41
  $region40: #{tpu_custom_call.1} parent=0 // pred_region
    _
  $region41: #{tpu_custom_call.1} parent=0 // pred_fallthru
    _
  // Predicated region
  $region42: #{tpu_custom_call.1} parent=0 // pred_check
    _
  $region43: #{tpu_custom_call.1} parent=0 // pred_check_branch
    %37 = sbr.rel (0) target = $region45
  $region44: #{tpu_custom_call.1} parent=0 // pred_region
    _
  $region45: #{tpu_custom_call.1} parent=0 // pred_fallthru
    _
  %v38 = vlaneseq
  %v39 = vshrl.u32 %v38, 7
  %v40 = vadd.s32 %v39, 8
  %v41 = vadd.s32 %v39, 16
  %v42 = vadd.s32 %v39, 24
  %v43 = vlaneseq
  %v44 = vand.u32 %v43, 127
  %v45 = vmul.u32 %v44, 16
  %vm46 = vcmp.ge.s32.totalorder %v39, %v45
  %vm47 = vcmp.ge.s32.totalorder %v40, %v45
  %vm48 = vcmp.ge.s32.totalorder %v41, %v45
  %vm49 = vcmp.ge.s32.totalorder %v42, %v45
  %v50 = vadd.s32 %v44, 1
  %v51 = vmul.u32 %v50, 16
  %vm52 = vcmp.lt.s32.totalorder %v39, %v51
  %vm53 = vcmp.lt.s32.totalorder %v40, %v51
  %vm54 = vcmp.lt.s32.totalorder %v41, %v51
  %vm55 = vcmp.lt.s32.totalorder %v42, %v51
  %vm56 = vmand %vm46, %vm52
  %vm57 = vmand %vm47, %vm53
  %vm58 = vmand %vm48, %vm54
  %vm59 = vmand %vm49, %vm55
  %v60 = vsel %vm56, 1, 0
  %v61 = vsel %vm57, 1, 0
  %v62 = vsel %vm58, 1, 0
  %v63 = vsel %vm59, 1, 0
  %v64 = vcvt.s32.f32 %v60
  %v65 = vcvt.s32.f32 %v61
  %v66 = vcvt.s32.f32 %v62
  %v67 = vcvt.s32.f32 %v63
  %v68 = vld [vmem:[%s0] sm:$0xf]
  %v69 = vld [vmem:[%s2] sm:$0xf]
  %71 = vset.pattern.permute.xlu0 0
  %72 = vperm.xlu0 %71, %v69
  %v73 = vpop.permute.xlu0 %72
  %v75 = vld [vmem:[%s4] sm:$0xf]
  %77 = vset.pattern.permute.xlu0 0
  %78 = vperm.xlu0 %77, %v75
  %v79 = vpop.permute.xlu0 %78
  %v81 = vld [vmem:[%s0] sm:$0x1]
  %v82 = vlaneseq
  %v83 = vshrl.u32 %v82, 7
  %v84 = vsub.s32 0, %v83
  %v85 = vrot.slane %v81, %v84
  %v86 = vmul.f32 %v85, %v68
  %vm87 = vcmask 257024
  %88 = vst.msk [vmem:[#allocation2] sm:$0xf] %vm87, %v86
  %v89 = vld [vmem:[%s0 + $0x1] sm:$0x1]
  %v90 = vlaneseq
  %v91 = vshrl.u32 %v90, 7
  %v92 = vsub.s32 0, %v91
  %v93 = vrot.slane %v89, %v92
  %v94 = vmul.f32 %v93, %v68
  %95 = vst.msk [vmem:[#allocation2 + $0x4] sm:$0xf] %vm87, %v94
  %v96 = vld [vmem:[%s0 + $0x2] sm:$0x1]
  %v97 = vlaneseq
  %v98 = vshrl.u32 %v97, 7
  %v99 = vsub.s32 0, %v98
  %v100 = vrot.slane %v96, %v99
  %v101 = vmul.f32 %v100, %v68
  %102 = vst.msk [vmem:[#allocation2 + $0x8] sm:$0xf] %vm87, %v101
  %v103 = vld [vmem:[%s0 + $0x3] sm:$0x1]
  %v104 = vlaneseq
  %v105 = vshrl.u32 %v104, 7
  %v106 = vsub.s32 0, %v105
  %v107 = vrot.slane %v103, %v106
  %v108 = vmul.f32 %v107, %v68
  %109 = vst.msk [vmem:[#allocation2 + $0xc] sm:$0xf] %vm87, %v108
  %v110 = vld [vmem:[#allocation2] sm:$0xff]
  %v111 = vld [vmem:[#allocation2 + $0x8] sm:$0xff]
  %v112 = vld [vmem:[%s1] sm:$0xf]
  %vm113 = vcmask 130048
  %v115 = vsel %vm113, %v112, 0
  %117 = vmatprep.subr.mxu0 0.0
  %118 = vmatpush1.msra.mxu0 %v110
  %119 = vmatprep.subr.mxu0 0.0
  %120 = vmatpush1.msra.mxu0 %v111
  %121 = vmatprep.subr.mxu0 0.0
  %122 = vmatpush1.msra.mxu0 0.0
  %123 = vmatprep.subr.mxu0 0.0
  %124 = vmatpush1.msra.mxu0 0.0
  %125 = vmatprep.subr.mxu0 0.0
  %126 = vmatpush1.msra.mxu0 0.0
  %127 = vmatprep.subr.mxu0 0.0
  %128 = vmatpush1.msra.mxu0 0.0
  %129 = vmatprep.subr.mxu0 0.0
  %130 = vmatpush1.msra.mxu0 0.0
  %131 = vmatprep.subr.mxu0 0.0
  %132 = vmatpush1.msra.mxu0 0.0
  %133 = vmatprep.subr.mxu0 0.0
  %134 = vmatpush1.msra.mxu0 0.0
  %135 = vmatprep.subr.mxu0 0.0
  %136 = vmatpush1.msra.mxu0 0.0
  %137 = vmatprep.subr.mxu0 0.0
  %138 = vmatpush1.msra.mxu0 0.0
  %139 = vmatprep.subr.mxu0 0.0
  %140 = vmatpush1.msra.mxu0 0.0
  %141 = vmatprep.subr.mxu0 0.0
  %142 = vmatpush1.msra.mxu0 0.0
  %143 = vmatprep.subr.mxu0 0.0
  %144 = vmatpush1.msra.mxu0 0.0
  %145 = vmatprep.subr.mxu0 0.0
  %146 = vmatpush1.msra.mxu0 0.0
  %147 = vmatprep.subr.mxu0 0.0
  %148 = vmatpush1.msra.mxu0 0.0
  %149 = vmatprep.subr.mxu0 0.0
  %150 = vmatpush1.msra.mxu0 0.0
  %151 = vmatprep.subr.mxu0 0.0
  %152 = vmatpush1.msra.mxu0 0.0
  %153 = vmatprep.subr.mxu0 0.0
  %154 = vmatpush1.msra.mxu0 0.0
  %155 = vmatprep.subr.mxu0 0.0
  %156 = vmatpush1.msra.mxu0 0.0
  %157 = vmatprep.subr.mxu0 0.0
  %158 = vmatpush1.msra.mxu0 0.0
  %159 = vmatprep.subr.mxu0 0.0
  %160 = vmatpush1.msra.mxu0 0.0
  %161 = vmatprep.subr.mxu0 0.0
  %162 = vmatpush1.msra.mxu0 0.0
  %163 = vmatprep.subr.mxu0 0.0
  %164 = vmatpush1.msra.mxu0 0.0
  %165 = vmatprep.subr.mxu0 0.0
  %166 = vmatpush1.msra.mxu0 0.0
  %167 = vmatprep.subr.mxu0 0.0
  %168 = vmatpush1.msra.mxu0 0.0
  %169 = vmatprep.subr.mxu0 0.0
  %170 = vmatpush1.msra.mxu0 0.0
  %171 = vmatprep.subr.mxu0 0.0
  %172 = vmatpush1.msra.mxu0 0.0
  %173 = vmatprep.subr.mxu0 0.0
  %174 = vmatpush1.msra.mxu0 0.0
  %175 = vmatprep.subr.mxu0 0.0
  %176 = vmatpush1.msra.mxu0 0.0
  %177 = vmatprep.subr.mxu0 0.0
  %178 = vmatpush1.msra.mxu0 0.0
  %179 = vmatprep.subr.mxu0 0.0
  %180 = vmatpush1.msra.mxu0 0.0
  %181 = vmatprep.mubr.f32.mxu0 0.0
  %182 = vmatmul.mubr.f32.gmra.mrb[0].mxu0 %v115
  %v183 = vpop.f32.mrb[0].mxu0
  %v184 = vadd.f32 0.0, %v183
  %v185 = vpop.f32.mrb[0].mxu0
  %186 = vdwg.mxu0
  %v187 = vadd.f32 %v73, %v184
  %v188 = vld [vmem:[%s3] sm:$0xf]
  %v190 = vsel %vm113, %v188, 0
  %192 = vmatprep.subr.mxu0 0.0
  %193 = vmatpush1.msra.mxu0 %v110
  %194 = vmatprep.subr.mxu0 0.0
  %195 = vmatpush1.msra.mxu0 %v111
  %196 = vmatprep.subr.mxu0 0.0
  %197 = vmatpush1.msra.mxu0 0.0
  %198 = vmatprep.subr.mxu0 0.0
  %199 = vmatpush1.msra.mxu0 0.0
  %200 = vmatprep.subr.mxu0 0.0
  %201 = vmatpush1.msra.mxu0 0.0
  %202 = vmatprep.subr.mxu0 0.0
  %203 = vmatpush1.msra.mxu0 0.0
  %204 = vmatprep.subr.mxu0 0.0
  %205 = vmatpush1.msra.mxu0 0.0
  %206 = vmatprep.subr.mxu0 0.0
  %207 = vmatpush1.msra.mxu0 0.0
  %208 = vmatprep.subr.mxu0 0.0
  %209 = vmatpush1.msra.mxu0 0.0
  %210 = vmatprep.subr.mxu0 0.0
  %211 = vmatpush1.msra.mxu0 0.0
  %212 = vmatprep.subr.mxu0 0.0
  %213 = vmatpush1.msra.mxu0 0.0
  %214 = vmatprep.subr.mxu0 0.0
  %215 = vmatpush1.msra.mxu0 0.0
  %216 = vmatprep.subr.mxu0 0.0
  %217 = vmatpush1.msra.mxu0 0.0
  %218 = vmatprep.subr.mxu0 0.0
  %219 = vmatpush1.msra.mxu0 0.0
  %220 = vmatprep.subr.mxu0 0.0
  %221 = vmatpush1.msra.mxu0 0.0
  %222 = vmatprep.subr.mxu0 0.0
  %223 = vmatpush1.msra.mxu0 0.0
  %224 = vmatprep.subr.mxu0 0.0
  %225 = vmatpush1.msra.mxu0 0.0
  %226 = vmatprep.subr.mxu0 0.0
  %227 = vmatpush1.msra.mxu0 0.0
  %228 = vmatprep.subr.mxu0 0.0
  %229 = vmatpush1.msra.mxu0 0.0
  %230 = vmatprep.subr.mxu0 0.0
  %231 = vmatpush1.msra.mxu0 0.0
  %232 = vmatprep.subr.mxu0 0.0
  %233 = vmatpush1.msra.mxu0 0.0
  %234 = vmatprep.subr.mxu0 0.0
  %235 = vmatpush1.msra.mxu0 0.0
  %236 = vmatprep.subr.mxu0 0.0
  %237 = vmatpush1.msra.mxu0 0.0
  %238 = vmatprep.subr.mxu0 0.0
  %239 = vmatpush1.msra.mxu0 0.0
  %240 = vmatprep.subr.mxu0 0.0
  %241 = vmatpush1.msra.mxu0 0.0
  %242 = vmatprep.subr.mxu0 0.0
  %243 = vmatpush1.msra.mxu0 0.0
  %244 = vmatprep.subr.mxu0 0.0
  %245 = vmatpush1.msra.mxu0 0.0
  %246 = vmatprep.subr.mxu0 0.0
  %247 = vmatpush1.msra.mxu0 0.0
  %248 = vmatprep.subr.mxu0 0.0
  %249 = vmatpush1.msra.mxu0 0.0
  %250 = vmatprep.subr.mxu0 0.0
  %251 = vmatpush1.msra.mxu0 0.0
  %252 = vmatprep.subr.mxu0 0.0
  %253 = vmatpush1.msra.mxu0 0.0
  %254 = vmatprep.subr.mxu0 0.0
  %255 = vmatpush1.msra.mxu0 0.0
  %256 = vmatprep.mubr.f32.mxu0 0.0
  %257 = vmatmul.mubr.f32.gmra.mrb[0].mxu0 %v190
  %v258 = vpop.f32.mrb[0].mxu0
  %v259 = vadd.f32 0.0, %v258
  %v260 = vpop.f32.mrb[0].mxu0
  %261 = vdwg.mxu0
  %v262 = vadd.f32 %v79, %v259
  %v263 = vmax.f32 %v187, 0.0
  %v264 = vmax.f32 %v262, 0.0
  %vm265 = vcmask 261120
  %v267 = vsel %vm265, %v263, 0
  %269 = vmatprep.subr.mxu0 0.0
  %270 = vmatpush1.msra.mxu0 %v64
  %271 = vmatprep.subr.mxu0 0.0
  %272 = vmatpush1.msra.mxu0 %v65
  %273 = vmatprep.subr.mxu0 0.0
  %274 = vmatpush1.msra.mxu0 %v66
  %275 = vmatprep.subr.mxu0 0.0
  %276 = vmatpush1.msra.mxu0 %v67
  %277 = vmatprep.subr.mxu0 0.0
  %278 = vmatpush1.msra.mxu0 0.0
  %279 = vmatprep.subr.mxu0 0.0
  %280 = vmatpush1.msra.mxu0 0.0
  %281 = vmatprep.subr.mxu0 0.0
  %282 = vmatpush1.msra.mxu0 0.0
  %283 = vmatprep.subr.mxu0 0.0
  %284 = vmatpush1.msra.mxu0 0.0
  %285 = vmatprep.subr.mxu0 0.0
  %286 = vmatpush1.msra.mxu0 0.0
  %287 = vmatprep.subr.mxu0 0.0
  %288 = vmatpush1.msra.mxu0 0.0
  %289 = vmatprep.subr.mxu0 0.0
  %290 = vmatpush1.msra.mxu0 0.0
  %291 = vmatprep.subr.mxu0 0.0
  %292 = vmatpush1.msra.mxu0 0.0
  %293 = vmatprep.subr.mxu0 0.0
  %294 = vmatpush1.msra.mxu0 0.0
  %295 = vmatprep.subr.mxu0 0.0
  %296 = vmatpush1.msra.mxu0 0.0
  %297 = vmatprep.subr.mxu0 0.0
  %298 = vmatpush1.msra.mxu0 0.0
  %299 = vmatprep.subr.mxu0 0.0
  %300 = vmatpush1.msra.mxu0 0.0
  %301 = vmatprep.subr.mxu0 0.0
  %302 = vmatpush1.msra.mxu0 0.0
  %303 = vmatprep.subr.mxu0 0.0
  %304 = vmatpush1.msra.mxu0 0.0
  %305 = vmatprep.subr.mxu0 0.0
  %306 = vmatpush1.msra.mxu0 0.0
  %307 = vmatprep.subr.mxu0 0.0
  %308 = vmatpush1.msra.mxu0 0.0
  %309 = vmatprep.subr.mxu0 0.0
  %310 = vmatpush1.msra.mxu0 0.0
  %311 = vmatprep.subr.mxu0 0.0
  %312 = vmatpush1.msra.mxu0 0.0
  %313 = vmatprep.subr.mxu0 0.0
  %314 = vmatpush1.msra.mxu0 0.0
  %315 = vmatprep.subr.mxu0 0.0
  %316 = vmatpush1.msra.mxu0 0.0
  %317 = vmatprep.subr.mxu0 0.0
  %318 = vmatpush1.msra.mxu0 0.0
  %319 = vmatprep.subr.mxu0 0.0
  %320 = vmatpush1.msra.mxu0 0.0
  %321 = vmatprep.subr.mxu0 0.0
  %322 = vmatpush1.msra.mxu0 0.0
  %323 = vmatprep.subr.mxu0 0.0
  %324 = vmatpush1.msra.mxu0 0.0
  %325 = vmatprep.subr.mxu0 0.0
  %326 = vmatpush1.msra.mxu0 0.0
  %327 = vmatprep.subr.mxu0 0.0
  %328 = vmatpush1.msra.mxu0 0.0
  %329 = vmatprep.subr.mxu0 0.0
  %330 = vmatpush1.msra.mxu0 0.0
  %331 = vmatprep.subr.mxu0 0.0
  %332 = vmatpush1.msra.mxu0 0.0
  %333 = vmatprep.mubr.f32.mxu0 0.0
  %334 = vmatmul.mubr.f32.gmra.mrb[0].mxu0 %v267
  %v335 = vpop.f32.mrb[0].mxu0
  %v336 = vadd.f32 0.0, %v335
  %v337 = vpop.f32.mrb[0].mxu0
  %338 = vdwg.mxu0
  %vm339 = vcmask 11264
  %340 = vst.msk [vmem:[%s11] sm:$0xf] %vm339, %v336
  %v341 = vld [vmem:[%s6] sm:$0xf]
  %343 = vset.pattern.permute.xlu0 0
  %344 = vperm.xlu0 %343, %v341
  %v345 = vpop.permute.xlu0 %344
  %v347 = vld [vmem:[%s8] sm:$0xf]
  %349 = vset.pattern.permute.xlu0 0
  %350 = vperm.xlu0 %349, %v347
  %v351 = vpop.permute.xlu0 %350
  %v353 = vld [vmem:[%s0] sm:$0x1]
  %v354 = vlaneseq
  %v355 = vshrl.u32 %v354, 7
  %v356 = vsub.s32 0, %v355
  %v357 = vrot.slane %v353, %v356
  %v358 = vmul.f32 %v357, %v264
  %359 = vst.msk [vmem:[#allocation2] sm:$0xf] %vm87, %v358
  %v360 = vld [vmem:[%s0 + $0x1] sm:$0x1]
  %v361 = vlaneseq
  %v362 = vshrl.u32 %v361, 7
  %v363 = vsub.s32 0, %v362
  %v364 = vrot.slane %v360, %v363
  %v365 = vmul.f32 %v364, %v264
  %366 = vst.msk [vmem:[#allocation2 + $0x4] sm:$0xf] %vm87, %v365
  %v367 = vld [vmem:[%s0 + $0x2] sm:$0x1]
  %v368 = vlaneseq
  %v369 = vshrl.u32 %v368, 7
  %v370 = vsub.s32 0, %v369
  %v371 = vrot.slane %v367, %v370
  %v372 = vmul.f32 %v371, %v264
  %373 = vst.msk [vmem:[#allocation2 + $0x8] sm:$0xf] %vm87, %v372
  %v374 = vld [vmem:[%s0 + $0x3] sm:$0x1]
  %v375 = vlaneseq
  %v376 = vshrl.u32 %v375, 7
  %v377 = vsub.s32 0, %v376
  %v378 = vrot.slane %v374, %v377
  %v379 = vmul.f32 %v378, %v264
  %380 = vst.msk [vmem:[#allocation2 + $0xc] sm:$0xf] %vm87, %v379
  %v381 = vld [vmem:[#allocation2] sm:$0xff]
  %v382 = vld [vmem:[#allocation2 + $0x8] sm:$0xff]
  %v383 = vld [vmem:[%s5] sm:$0xf]
  %v385 = vsel %vm113, %v383, 0
  %387 = vmatprep.subr.mxu0 0.0
  %388 = vmatpush1.msra.mxu0 %v381
  %389 = vmatprep.subr.mxu0 0.0
  %390 = vmatpush1.msra.mxu0 %v382
  %391 = vmatprep.subr.mxu0 0.0
  %392 = vmatpush1.msra.mxu0 0.0
  %393 = vmatprep.subr.mxu0 0.0
  %394 = vmatpush1.msra.mxu0 0.0
  %395 = vmatprep.subr.mxu0 0.0
  %396 = vmatpush1.msra.mxu0 0.0
  %397 = vmatprep.subr.mxu0 0.0
  %398 = vmatpush1.msra.mxu0 0.0
  %399 = vmatprep.subr.mxu0 0.0
  %400 = vmatpush1.msra.mxu0 0.0
  %401 = vmatprep.subr.mxu0 0.0
  %402 = vmatpush1.msra.mxu0 0.0
  %403 = vmatprep.subr.mxu0 0.0
  %404 = vmatpush1.msra.mxu0 0.0
  %405 = vmatprep.subr.mxu0 0.0
  %406 = vmatpush1.msra.mxu0 0.0
  %407 = vmatprep.subr.mxu0 0.0
  %408 = vmatpush1.msra.mxu0 0.0
  %409 = vmatprep.subr.mxu0 0.0
  %410 = vmatpush1.msra.mxu0 0.0
  %411 = vmatprep.subr.mxu0 0.0
  %412 = vmatpush1.msra.mxu0 0.0
  %413 = vmatprep.subr.mxu0 0.0
  %414 = vmatpush1.msra.mxu0 0.0
  %415 = vmatprep.subr.mxu0 0.0
  %416 = vmatpush1.msra.mxu0 0.0
  %417 = vmatprep.subr.mxu0 0.0
  %418 = vmatpush1.msra.mxu0 0.0
  %419 = vmatprep.subr.mxu0 0.0
  %420 = vmatpush1.msra.mxu0 0.0
  %421 = vmatprep.subr.mxu0 0.0
  %422 = vmatpush1.msra.mxu0 0.0
  %423 = vmatprep.subr.mxu0 0.0
  %424 = vmatpush1.msra.mxu0 0.0
  %425 = vmatprep.subr.mxu0 0.0
  %426 = vmatpush1.msra.mxu0 0.0
  %427 = vmatprep.subr.mxu0 0.0
  %428 = vmatpush1.msra.mxu0 0.0
  %429 = vmatprep.subr.mxu0 0.0
  %430 = vmatpush1.msra.mxu0 0.0
  %431 = vmatprep.subr.mxu0 0.0
  %432 = vmatpush1.msra.mxu0 0.0
  %433 = vmatprep.subr.mxu0 0.0
  %434 = vmatpush1.msra.mxu0 0.0
  %435 = vmatprep.subr.mxu0 0.0
  %436 = vmatpush1.msra.mxu0 0.0
  %437 = vmatprep.subr.mxu0 0.0
  %438 = vmatpush1.msra.mxu0 0.0
  %439 = vmatprep.subr.mxu0 0.0
  %440 = vmatpush1.msra.mxu0 0.0
  %441 = vmatprep.subr.mxu0 0.0
  %442 = vmatpush1.msra.mxu0 0.0
  %443 = vmatprep.subr.mxu0 0.0
  %444 = vmatpush1.msra.mxu0 0.0
  %445 = vmatprep.subr.mxu0 0.0
  %446 = vmatpush1.msra.mxu0 0.0
  %447 = vmatprep.subr.mxu0 0.0
  %448 = vmatpush1.msra.mxu0 0.0
  %449 = vmatprep.subr.mxu0 0.0
  %450 = vmatpush1.msra.mxu0 0.0
  %451 = vmatprep.mubr.f32.mxu0 0.0
  %452 = vmatmul.mubr.f32.gmra.mrb[0].mxu0 %v385
  %v453 = vpop.f32.mrb[0].mxu0
  %v454 = vadd.f32 0.0, %v453
  %v455 = vpop.f32.mrb[0].mxu0
  %456 = vdwg.mxu0
  %v457 = vadd.f32 %v345, %v454
  %v458 = vld [vmem:[%s7] sm:$0xf]
  %v460 = vsel %vm113, %v458, 0
  %462 = vmatprep.subr.mxu0 0.0
  %463 = vmatpush1.msra.mxu0 %v381
  %464 = vmatprep.subr.mxu0 0.0
  %465 = vmatpush1.msra.mxu0 %v382
  %466 = vmatprep.subr.mxu0 0.0
  %467 = vmatpush1.msra.mxu0 0.0
  %468 = vmatprep.subr.mxu0 0.0
  %469 = vmatpush1.msra.mxu0 0.0
  %470 = vmatprep.subr.mxu0 0.0
  %471 = vmatpush1.msra.mxu0 0.0
  %472 = vmatprep.subr.mxu0 0.0
  %473 = vmatpush1.msra.mxu0 0.0
  %474 = vmatprep.subr.mxu0 0.0
  %475 = vmatpush1.msra.mxu0 0.0
  %476 = vmatprep.subr.mxu0 0.0
  %477 = vmatpush1.msra.mxu0 0.0
  %478 = vmatprep.subr.mxu0 0.0
  %479 = vmatpush1.msra.mxu0 0.0
  %480 = vmatprep.subr.mxu0 0.0
  %481 = vmatpush1.msra.mxu0 0.0
  %482 = vmatprep.subr.mxu0 0.0
  %483 = vmatpush1.msra.mxu0 0.0
  %484 = vmatprep.subr.mxu0 0.0
  %485 = vmatpush1.msra.mxu0 0.0
  %486 = vmatprep.subr.mxu0 0.0
  %487 = vmatpush1.msra.mxu0 0.0
  %488 = vmatprep.subr.mxu0 0.0
  %489 = vmatpush1.msra.mxu0 0.0
  %490 = vmatprep.subr.mxu0 0.0
  %491 = vmatpush1.msra.mxu0 0.0
  %492 = vmatprep.subr.mxu0 0.0
  %493 = vmatpush1.msra.mxu0 0.0
  %494 = vmatprep.subr.mxu0 0.0
  %495 = vmatpush1.msra.mxu0 0.0
  %496 = vmatprep.subr.mxu0 0.0
  %497 = vmatpush1.msra.mxu0 0.0
  %498 = vmatprep.subr.mxu0 0.0
  %499 = vmatpush1.msra.mxu0 0.0
  %500 = vmatprep.subr.mxu0 0.0
  %501 = vmatpush1.msra.mxu0 0.0
  %502 = vmatprep.subr.mxu0 0.0
  %503 = vmatpush1.msra.mxu0 0.0
  %504 = vmatprep.subr.mxu0 0.0
  %505 = vmatpush1.msra.mxu0 0.0
  %506 = vmatprep.subr.mxu0 0.0
  %507 = vmatpush1.msra.mxu0 0.0
  %508 = vmatprep.subr.mxu0 0.0
  %509 = vmatpush1.msra.mxu0 0.0
  %510 = vmatprep.subr.mxu0 0.0
  %511 = vmatpush1.msra.mxu0 0.0
  %512 = vmatprep.subr.mxu0 0.0
  %513 = vmatpush1.msra.mxu0 0.0
  %514 = vmatprep.subr.mxu0 0.0
  %515 = vmatpush1.msra.mxu0 0.0
  %516 = vmatprep.subr.mxu0 0.0
  %517 = vmatpush1.msra.mxu0 0.0
  %518 = vmatprep.subr.mxu0 0.0
  %519 = vmatpush1.msra.mxu0 0.0
  %520 = vmatprep.subr.mxu0 0.0
  %521 = vmatpush1.msra.mxu0 0.0
  %522 = vmatprep.subr.mxu0 0.0
  %523 = vmatpush1.msra.mxu0 0.0
  %524 = vmatprep.subr.mxu0 0.0
  %525 = vmatpush1.msra.mxu0 0.0
  %526 = vmatprep.mubr.f32.mxu0 0.0
  %527 = vmatmul.mubr.f32.gmra.mrb[0].mxu0 %v460
  %v528 = vpop.f32.mrb[0].mxu0
  %v529 = vadd.f32 0.0, %v528
  %v530 = vpop.f32.mrb[0].mxu0
  %531 = vdwg.mxu0
  %v532 = vadd.f32 %v351, %v529
  %v533 = vmax.f32 %v457, 0.0
  %v534 = vmax.f32 %v532, 0.0
  %v536 = vsel %vm265, %v533, 0
  %538 = vmatprep.subr.mxu0 0.0
  %539 = vmatpush1.msra.mxu0 %v64
  %540 = vmatprep.subr.mxu0 0.0
  %541 = vmatpush1.msra.mxu0 %v65
  %542 = vmatprep.subr.mxu0 0.0
  %543 = vmatpush1.msra.mxu0 %v66
  %544 = vmatprep.subr.mxu0 0.0
  %545 = vmatpush1.msra.mxu0 %v67
  %546 = vmatprep.subr.mxu0 0.0
  %547 = vmatpush1.msra.mxu0 0.0
  %548 = vmatprep.subr.mxu0 0.0
  %549 = vmatpush1.msra.mxu0 0.0
  %550 = vmatprep.subr.mxu0 0.0
  %551 = vmatpush1.msra.mxu0 0.0
  %552 = vmatprep.subr.mxu0 0.0
  %553 = vmatpush1.msra.mxu0 0.0
  %554 = vmatprep.subr.mxu0 0.0
  %555 = vmatpush1.msra.mxu0 0.0
  %556 = vmatprep.subr.mxu0 0.0
  %557 = vmatpush1.msra.mxu0 0.0
  %558 = vmatprep.subr.mxu0 0.0
  %559 = vmatpush1.msra.mxu0 0.0
  %560 = vmatprep.subr.mxu0 0.0
  %561 = vmatpush1.msra.mxu0 0.0
  %562 = vmatprep.subr.mxu0 0.0
  %563 = vmatpush1.msra.mxu0 0.0
  %564 = vmatprep.subr.mxu0 0.0
  %565 = vmatpush1.msra.mxu0 0.0
  %566 = vmatprep.subr.mxu0 0.0
  %567 = vmatpush1.msra.mxu0 0.0
  %568 = vmatprep.subr.mxu0 0.0
  %569 = vmatpush1.msra.mxu0 0.0
  %570 = vmatprep.subr.mxu0 0.0
  %571 = vmatpush1.msra.mxu0 0.0
  %572 = vmatprep.subr.mxu0 0.0
  %573 = vmatpush1.msra.mxu0 0.0
  %574 = vmatprep.subr.mxu0 0.0
  %575 = vmatpush1.msra.mxu0 0.0
  %576 = vmatprep.subr.mxu0 0.0
  %577 = vmatpush1.msra.mxu0 0.0
  %578 = vmatprep.subr.mxu0 0.0
  %579 = vmatpush1.msra.mxu0 0.0
  %580 = vmatprep.subr.mxu0 0.0
  %581 = vmatpush1.msra.mxu0 0.0
  %582 = vmatprep.subr.mxu0 0.0
  %583 = vmatpush1.msra.mxu0 0.0
  %584 = vmatprep.subr.mxu0 0.0
  %585 = vmatpush1.msra.mxu0 0.0
  %586 = vmatprep.subr.mxu0 0.0
  %587 = vmatpush1.msra.mxu0 0.0
  %588 = vmatprep.subr.mxu0 0.0
  %589 = vmatpush1.msra.mxu0 0.0
  %590 = vmatprep.subr.mxu0 0.0
  %591 = vmatpush1.msra.mxu0 0.0
  %592 = vmatprep.subr.mxu0 0.0
  %593 = vmatpush1.msra.mxu0 0.0
  %594 = vmatprep.subr.mxu0 0.0
  %595 = vmatpush1.msra.mxu0 0.0
  %596 = vmatprep.subr.mxu0 0.0
  %597 = vmatpush1.msra.mxu0 0.0
  %598 = vmatprep.subr.mxu0 0.0
  %599 = vmatpush1.msra.mxu0 0.0
  %600 = vmatprep.subr.mxu0 0.0
  %601 = vmatpush1.msra.mxu0 0.0
  %602 = vmatprep.mubr.f32.mxu0 0.0
  %603 = vmatmul.mubr.f32.gmra.mrb[0].mxu0 %v536
  %v604 = vpop.f32.mrb[0].mxu0
  %v605 = vadd.f32 0.0, %v604
  %v606 = vpop.f32.mrb[0].mxu0
  %607 = vdwg.mxu0
  %608 = vst.msk [vmem:[%s11 + $0x8] sm:$0xf] %vm339, %v605
  %v609 = vld [vmem:[%s10] sm:$0xf]
  %611 = vset.pattern.permute.xlu0 0
  %612 = vperm.xlu0 %611, %v609
  %v613 = vpop.permute.xlu0 %612
  %v615 = vld [vmem:[%s0] sm:$0x1]
  %v616 = vlaneseq
  %v617 = vshrl.u32 %v616, 7
  %v618 = vsub.s32 0, %v617
  %v619 = vrot.slane %v615, %v618
  %v620 = vmul.f32 %v619, %v534
  %621 = vst.msk [vmem:[#allocation2] sm:$0xf] %vm87, %v620
  %v622 = vld [vmem:[%s0 + $0x1] sm:$0x1]
  %v623 = vlaneseq
  %v624 = vshrl.u32 %v623, 7
  %v625 = vsub.s32 0, %v624
  %v626 = vrot.slane %v622, %v625
  %v627 = vmul.f32 %v626, %v534
  %628 = vst.msk [vmem:[#allocation2 + $0x4] sm:$0xf] %vm87, %v627
  %v629 = vld [vmem:[%s0 + $0x2] sm:$0x1]
  %v630 = vlaneseq
  %v631 = vshrl.u32 %v630, 7
  %v632 = vsub.s32 0, %v631
  %v633 = vrot.slane %v629, %v632
  %v634 = vmul.f32 %v633, %v534
  %635 = vst.msk [vmem:[#allocation2 + $0x8] sm:$0xf] %vm87, %v634
  %v636 = vld [vmem:[%s0 + $0x3] sm:$0x1]
  %v637 = vlaneseq
  %v638 = vshrl.u32 %v637, 7
  %v639 = vsub.s32 0, %v638
  %v640 = vrot.slane %v636, %v639
  %v641 = vmul.f32 %v640, %v534
  %642 = vst.msk [vmem:[#allocation2 + $0xc] sm:$0xf] %vm87, %v641
  %v643 = vld [vmem:[#allocation2] sm:$0xff]
  %v644 = vld [vmem:[#allocation2 + $0x8] sm:$0xff]
  %v645 = vld [vmem:[%s9] sm:$0xf]
  %v647 = vsel %vm113, %v645, 0
  %649 = vmatprep.subr.mxu0 0.0
  %650 = vmatpush1.msra.mxu0 %v643
  %651 = vmatprep.subr.mxu0 0.0
  %652 = vmatpush1.msra.mxu0 %v644
  %653 = vmatprep.subr.mxu0 0.0
  %654 = vmatpush1.msra.mxu0 0.0
  %655 = vmatprep.subr.mxu0 0.0
  %656 = vmatpush1.msra.mxu0 0.0
  %657 = vmatprep.subr.mxu0 0.0
  %658 = vmatpush1.msra.mxu0 0.0
  %659 = vmatprep.subr.mxu0 0.0
  %660 = vmatpush1.msra.mxu0 0.0
  %661 = vmatprep.subr.mxu0 0.0
  %662 = vmatpush1.msra.mxu0 0.0
  %663 = vmatprep.subr.mxu0 0.0
  %664 = vmatpush1.msra.mxu0 0.0
  %665 = vmatprep.subr.mxu0 0.0
  %666 = vmatpush1.msra.mxu0 0.0
  %667 = vmatprep.subr.mxu0 0.0
  %668 = vmatpush1.msra.mxu0 0.0
  %669 = vmatprep.subr.mxu0 0.0
  %670 = vmatpush1.msra.mxu0 0.0
  %671 = vmatprep.subr.mxu0 0.0
  %672 = vmatpush1.msra.mxu0 0.0
  %673 = vmatprep.subr.mxu0 0.0
  %674 = vmatpush1.msra.mxu0 0.0
  %675 = vmatprep.subr.mxu0 0.0
  %676 = vmatpush1.msra.mxu0 0.0
  %677 = vmatprep.subr.mxu0 0.0
  %678 = vmatpush1.msra.mxu0 0.0
  %679 = vmatprep.subr.mxu0 0.0
  %680 = vmatpush1.msra.mxu0 0.0
  %681 = vmatprep.subr.mxu0 0.0
  %682 = vmatpush1.msra.mxu0 0.0
  %683 = vmatprep.subr.mxu0 0.0
  %684 = vmatpush1.msra.mxu0 0.0
  %685 = vmatprep.subr.mxu0 0.0
  %686 = vmatpush1.msra.mxu0 0.0
  %687 = vmatprep.subr.mxu0 0.0
  %688 = vmatpush1.msra.mxu0 0.0
  %689 = vmatprep.subr.mxu0 0.0
  %690 = vmatpush1.msra.mxu0 0.0
  %691 = vmatprep.subr.mxu0 0.0
  %692 = vmatpush1.msra.mxu0 0.0
  %693 = vmatprep.subr.mxu0 0.0
  %694 = vmatpush1.msra.mxu0 0.0
  %695 = vmatprep.subr.mxu0 0.0
  %696 = vmatpush1.msra.mxu0 0.0
  %697 = vmatprep.subr.mxu0 0.0
  %698 = vmatpush1.msra.mxu0 0.0
  %699 = vmatprep.subr.mxu0 0.0
  %700 = vmatpush1.msra.mxu0 0.0
  %701 = vmatprep.subr.mxu0 0.0
  %702 = vmatpush1.msra.mxu0 0.0
  %703 = vmatprep.subr.mxu0 0.0
  %704 = vmatpush1.msra.mxu0 0.0
  %705 = vmatprep.subr.mxu0 0.0
  %706 = vmatpush1.msra.mxu0 0.0
  %707 = vmatprep.subr.mxu0 0.0
  %708 = vmatpush1.msra.mxu0 0.0
  %709 = vmatprep.subr.mxu0 0.0
  %710 = vmatpush1.msra.mxu0 0.0
  %711 = vmatprep.subr.mxu0 0.0
  %712 = vmatpush1.msra.mxu0 0.0
  %713 = vmatprep.mubr.f32.mxu0 0.0
  %714 = vmatmul.mubr.f32.gmra.mrb[0].mxu0 %v647
  %v715 = vpop.f32.mrb[0].mxu0
  %v716 = vadd.f32 0.0, %v715
  %v717 = vpop.f32.mrb[0].mxu0
  %718 = vdwg.mxu0
  %v719 = vadd.f32 %v613, %v716
  %v720 = vmax.f32 %v719, 0.0
  %v722 = vsel %vm265, %v720, 0
  %724 = vmatprep.subr.mxu0 0.0
  %725 = vmatpush1.msra.mxu0 %v64
  %726 = vmatprep.subr.mxu0 0.0
  %727 = vmatpush1.msra.mxu0 %v65
  %728 = vmatprep.subr.mxu0 0.0
  %729 = vmatpush1.msra.mxu0 %v66
  %730 = vmatprep.subr.mxu0 0.0
  %731 = vmatpush1.msra.mxu0 %v67
  %732 = vmatprep.subr.mxu0 0.0
  %733 = vmatpush1.msra.mxu0 0.0
  %734 = vmatprep.subr.mxu0 0.0
  %735 = vmatpush1.msra.mxu0 0.0
  %736 = vmatprep.subr.mxu0 0.0
  %737 = vmatpush1.msra.mxu0 0.0
  %738 = vmatprep.subr.mxu0 0.0
  %739 = vmatpush1.msra.mxu0 0.0
  %740 = vmatprep.subr.mxu0 0.0
  %741 = vmatpush1.msra.mxu0 0.0
  %742 = vmatprep.subr.mxu0 0.0
  %743 = vmatpush1.msra.mxu0 0.0
  %744 = vmatprep.subr.mxu0 0.0
  %745 = vmatpush1.msra.mxu0 0.0
  %746 = vmatprep.subr.mxu0 0.0
  %747 = vmatpush1.msra.mxu0 0.0
  %748 = vmatprep.subr.mxu0 0.0
  %749 = vmatpush1.msra.mxu0 0.0
  %750 = vmatprep.subr.mxu0 0.0
  %751 = vmatpush1.msra.mxu0 0.0
  %752 = vmatprep.subr.mxu0 0.0
  %753 = vmatpush1.msra.mxu0 0.0
  %754 = vmatprep.subr.mxu0 0.0
  %755 = vmatpush1.msra.mxu0 0.0
  %756 = vmatprep.subr.mxu0 0.0
  %757 = vmatpush1.msra.mxu0 0.0
  %758 = vmatprep.subr.mxu0 0.0
  %759 = vmatpush1.msra.mxu0 0.0
  %760 = vmatprep.subr.mxu0 0.0
  %761 = vmatpush1.msra.mxu0 0.0
  %762 = vmatprep.subr.mxu0 0.0
  %763 = vmatpush1.msra.mxu0 0.0
  %764 = vmatprep.subr.mxu0 0.0
  %765 = vmatpush1.msra.mxu0 0.0
  %766 = vmatprep.subr.mxu0 0.0
  %767 = vmatpush1.msra.mxu0 0.0
  %768 = vmatprep.subr.mxu0 0.0
  %769 = vmatpush1.msra.mxu0 0.0
  %770 = vmatprep.subr.mxu0 0.0
  %771 = vmatpush1.msra.mxu0 0.0
  %772 = vmatprep.subr.mxu0 0.0
  %773 = vmatpush1.msra.mxu0 0.0
  %774 = vmatprep.subr.mxu0 0.0
  %775 = vmatpush1.msra.mxu0 0.0
  %776 = vmatprep.subr.mxu0 0.0
  %777 = vmatpush1.msra.mxu0 0.0
  %778 = vmatprep.subr.mxu0 0.0
  %779 = vmatpush1.msra.mxu0 0.0
  %780 = vmatprep.subr.mxu0 0.0
  %781 = vmatpush1.msra.mxu0 0.0
  %782 = vmatprep.subr.mxu0 0.0
  %783 = vmatpush1.msra.mxu0 0.0
  %784 = vmatprep.subr.mxu0 0.0
  %785 = vmatpush1.msra.mxu0 0.0
  %786 = vmatprep.subr.mxu0 0.0
  %787 = vmatpush1.msra.mxu0 0.0
  %788 = vmatprep.mubr.f32.mxu0 0.0
  %789 = vmatmul.mubr.f32.gmra.mrb[0].mxu0 %v722
  %v790 = vpop.f32.mrb[0].mxu0
  %v791 = vadd.f32 0.0, %v790
  %v792 = vpop.f32.mrb[0].mxu0
  %793 = vdwg.mxu0
  %794 = vst.msk [vmem:[%s11 + $0x10] sm:$0xf] %vm339, %v791
  // Predicated region
  $region46: #{tpu_custom_call.1} parent=0 // pred_check
    _
  $region47: #{tpu_custom_call.1} parent=0 // pred_check_branch
    %796 = sbr.rel (0) target = $region49
  $region48: #{tpu_custom_call.1} parent=0 // pred_region
    _
  $region49: #{tpu_custom_call.1} parent=0 // pred_fallthru
    _
  // Predicated region
  $region50: #{tpu_custom_call.1} parent=0 // pred_check
    _
  $region51: #{tpu_custom_call.1} parent=0 // pred_check_branch
    %798 = sbr.rel (0) target = $region53
  $region52: #{tpu_custom_call.1} parent=0 // pred_region
    _
  $region53: #{tpu_custom_call.1} parent=0 // pred_fallthru
    _

// kernel: tpu_custom_call.1
$region0: #{tpu_custom_call.1}
  #allocation0 [shape = 'u32[]', space=smem, size = 0x4, offset = 0x4, fixed_abs, tag = 'smem constant byte address 0x4 - core index']
  #allocation1 [shape = 'u32[144,128]{1,0:T(1,128)}', space=vmem, size = 0x12000, scoped, tag = 'internal scratch']
  #allocation2 [shape = 'f32[16,32]{1,0:T(8,128)}', space=vmem, size = 0x2000, scoped, tag = 'scratch operand']
  %s0 = inlined_call_operand.vmem [shape: f32[4,32], index: 0, kind: input, shape index: {}]
  %s1 = inlined_call_operand.vmem [shape: f32[4,16], index: 1, kind: input, shape index: {}]
  %s2 = inlined_call_operand.vmem [shape: f32[4,1], index: 2, kind: input, shape index: {}]
  %s3 = inlined_call_operand.vmem [shape: f32[4,16], index: 3, kind: input, shape index: {}]
  %s4 = inlined_call_operand.vmem [shape: f32[4,1], index: 4, kind: input, shape index: {}]
  %s5 = inlined_call_operand.vmem [shape: f32[4,16], index: 5, kind: input, shape index: {}]
  %s6 = inlined_call_operand.vmem [shape: f32[4,1], index: 6, kind: input, shape index: {}]
  %s7 = inlined_call_operand.vmem [shape: f32[4,16], index: 7, kind: input, shape index: {}]
  %s8 = inlined_call_operand.vmem [shape: f32[4,1], index: 8, kind: input, shape index: {}]
  %s9 = inlined_call_operand.vmem [shape: f32[4,16], index: 9, kind: input, shape index: {}]
  %s10 = inlined_call_operand.vmem [shape: f32[4,1], index: 10, kind: input, shape index: {}]
  %s11 = inlined_call_operand.vmem [shape: f32[24,2], index: 11, kind: output, shape index: {}]
  %s12 = sld [smem:[#allocation0]]
  $region54: #{tpu_custom_call.1} parent=0
    _
  %s14 = ssub.s32 1, %s12
  %s15 = scalar_select 0, %s14, %s12
  // Predicated region
  $region2: #{tpu_custom_call.1} parent=0 // pred_check
    _
  $region3: #{tpu_custom_call.1} parent=0 // pred_check_branch
    %17 = sbr.rel (0) target = $region5
  $region4: #{tpu_custom_call.1} parent=0 // pred_region
    _
  $region5: #{tpu_custom_call.1} parent=0 // pred_fallthru
    _
  // Predicated region
  $region6: #{tpu_custom_call.1} parent=0 // pred_check
    _
  $region7: #{tpu_custom_call.1} parent=0 // pred_check_branch
    %19 = sbr.rel (0) target = $region9
  $region8: #{tpu_custom_call.1} parent=0 // pred_region
    _
  $region9: #{tpu_custom_call.1} parent=0 // pred_fallthru
    _
  // Predicated region
  $region10: #{tpu_custom_call.1} parent=0 // pred_check
    _
  $region11: #{tpu_custom_call.1} parent=0 // pred_check_branch
    %21 = sbr.rel (0) target = $region13
  $region12: #{tpu_custom_call.1} parent=0 // pred_region
    _
  $region13: #{tpu_custom_call.1} parent=0 // pred_fallthru
    _
  // Predicated region
  $region14: #{tpu_custom_call.1} parent=0 // pred_check
    _
  $region15: #{tpu_custom_call.1} parent=0 // pred_check_branch
    %23 = sbr.rel (0) target = $region17
  $region16: #{tpu_custom_call.1} parent=0 // pred_region
    _
  $region17: #{tpu_custom_call.1} parent=0 // pred_fallthru
    _
  // Predicated region
  $region18: #{tpu_custom_call.1} parent=0 // pred_check
    _
  $region19: #{tpu_custom_call.1} parent=0 // pred_check_branch
    %25 = sbr.rel (0) target = $region21
  $region20: #{tpu_custom_call.1} parent=0 // pred_region
    _
  $region21: #{tpu_custom_call.1} parent=0 // pred_fallthru
    _
  // Predicated region
  $region22: #{tpu_custom_call.1} parent=0 // pred_check
    _
  $region23: #{tpu_custom_call.1} parent=0 // pred_check_branch
    %27 = sbr.rel (0) target = $region25
  $region24: #{tpu_custom_call.1} parent=0 // pred_region
    _
  $region25: #{tpu_custom_call.1} parent=0 // pred_fallthru
    _
  // Predicated region
  $region26: #{tpu_custom_call.1} parent=0 // pred_check
    _
  $region27: #{tpu_custom_call.1} parent=0 // pred_check_branch
    %29 = sbr.rel (0) target = $region29
  $region28: #{tpu_custom_call.1} parent=0 // pred_region
    _
  $region29: #{tpu_custom_call.1} parent=0 // pred_fallthru
    _
  // Predicated region
  $region30: #{tpu_custom_call.1} parent=0 // pred_check
    _
  $region31: #{tpu_custom_call.1} parent=0 // pred_check_branch
    %31 = sbr.rel (0) target = $region33
  $region32: #{tpu_custom_call.1} parent=0 // pred_region
    _
  $region33: #{tpu_custom_call.1} parent=0 // pred_fallthru
    _
  // Predicated region
  $region34: #{tpu_custom_call.1} parent=0 // pred_check
    _
  $region35: #{tpu_custom_call.1} parent=0 // pred_check_branch
    %33 = sbr.rel (0) target = $region37
  $region36: #{tpu_custom_call.1} parent=0 // pred_region
    _
  $region37: #{tpu_custom_call.1} parent=0 // pred_fallthru
    _
  // Predicated region
  $region38: #{tpu_custom_call.1} parent=0 // pred_check
    _
  $region39: #{tpu_custom_call.1} parent=0 // pred_check_branch
    %35 = sbr.rel (0) target = $region41
  $region40: #{tpu_custom_call.1} parent=0 // pred_region
    _
  $region41: #{tpu_custom_call.1} parent=0 // pred_fallthru
    _
  // Predicated region
  $region42: #{tpu_custom_call.1} parent=0 // pred_check
    _
  $region43: #{tpu_custom_call.1} parent=0 // pred_check_branch
    %37 = sbr.rel (0) target = $region45
  $region44: #{tpu_custom_call.1} parent=0 // pred_region
    _
  $region45: #{tpu_custom_call.1} parent=0 // pred_fallthru
    _
  %v38 = vlaneseq
  %v39 = vshrl.u32 %v38, 7
  %v40 = vadd.s32 %v39, 8
  %v41 = vadd.s32 %v39, 16
  %v42 = vadd.s32 %v39, 24
  %v43 = vlaneseq
  %v44 = vand.u32 %v43, 127
  %v45 = vmul.u32 %v44, 16
  %vm46 = vcmp.ge.s32.totalorder %v39, %v45
  %vm47 = vcmp.ge.s32.totalorder %v40, %v45
  %vm48 = vcmp.ge.s32.totalorder %v41, %v45
  %vm49 = vcmp.ge.s32.totalorder %v42, %v45
  %v50 = vadd.s32 %v44, 1
  %v51 = vmul.u32 %v50, 16
  %vm52 = vcmp.lt.s32.totalorder %v39, %v51
  %vm53 = vcmp.lt.s32.totalorder %v40, %v51
  %vm54 = vcmp.lt.s32.totalorder %v41, %v51
  %vm55 = vcmp.lt.s32.totalorder %v42, %v51
  %vm56 = vmand %vm46, %vm52
  %vm57 = vmand %vm47, %vm53
  %vm58 = vmand %vm48, %vm54
  %vm59 = vmand %vm49, %vm55
  %v60 = vsel %vm56, 1, 0
  %v61 = vsel %vm57, 1, 0
  %v62 = vsel %vm58, 1, 0
  %v63 = vsel %vm59, 1, 0
  %v64 = vcvt.s32.f32 %v60
  %v65 = vcvt.s32.f32 %v61
  %v66 = vcvt.s32.f32 %v62
  %v67 = vcvt.s32.f32 %v63
  %v68 = vld [vmem:[%s0] sm:$0xf]
  %v69 = vld [vmem:[%s2] sm:$0xf]
  %71 = vset.pattern.permute.xlu0 0
  %72 = vperm.xlu0 %71, %v69
  %v73 = vpop.permute.xlu0 %72
  %v75 = vld [vmem:[%s4] sm:$0xf]
  %77 = vset.pattern.permute.xlu0 0
  %78 = vperm.xlu0 %77, %v75
  %v79 = vpop.permute.xlu0 %78
  %v81 = vld [vmem:[%s0] sm:$0x1]
  %v82 = vlaneseq
  %v83 = vshrl.u32 %v82, 7
  %v84 = vsub.s32 0, %v83
  %v85 = vrot.slane %v81, %v84
  %v86 = vmul.f32 %v85, %v68
  %vm87 = vcmask 257024
  %88 = vst.msk [vmem:[#allocation2] sm:$0xf] %vm87, %v86
  %v89 = vld [vmem:[%s0 + $0x1] sm:$0x1]
  %v90 = vlaneseq
  %v91 = vshrl.u32 %v90, 7
  %v92 = vsub.s32 0, %v91
  %v93 = vrot.slane %v89, %v92
  %v94 = vmul.f32 %v93, %v68
  %95 = vst.msk [vmem:[#allocation2 + $0x4] sm:$0xf] %vm87, %v94
  %v96 = vld [vmem:[%s0 + $0x2] sm:$0x1]
  %v97 = vlaneseq
  %v98 = vshrl.u32 %v97, 7
  %v99 = vsub.s32 0, %v98
  %v100 = vrot.slane %v96, %v99
  %v101 = vmul.f32 %v100, %v68
  %102 = vst.msk [vmem:[#allocation2 + $0x8] sm:$0xf] %vm87, %v101
  %v103 = vld [vmem:[%s0 + $0x3] sm:$0x1]
  %v104 = vlaneseq
  %v105 = vshrl.u32 %v104, 7
  %v106 = vsub.s32 0, %v105
  %v107 = vrot.slane %v103, %v106
  %v108 = vmul.f32 %v107, %v68
  %109 = vst.msk [vmem:[#allocation2 + $0xc] sm:$0xf] %vm87, %v108
  %v110 = vld [vmem:[#allocation2] sm:$0xff]
  %v111 = vld [vmem:[#allocation2 + $0x8] sm:$0xff]
  %v112 = vld [vmem:[%s1] sm:$0xf]
  %vm113 = vcmask 130048
  %v115 = vsel %vm113, %v112, 0
  %117 = vmatprep.subr.mxu0 0.0
  %118 = vmatpush1.msra.mxu0 %v110
  %119 = vmatprep.subr.mxu0 0.0
  %120 = vmatpush1.msra.mxu0 %v111
  %121 = vmatprep.subr.mxu0 0.0
  %122 = vmatpush1.msra.mxu0 0.0
  %123 = vmatprep.subr.mxu0 0.0
  %124 = vmatpush1.msra.mxu0 0.0
  %125 = vmatprep.subr.mxu0 0.0
  %126 = vmatpush1.msra.mxu0 0.0
  %127 = vmatprep.subr.mxu0 0.0
  %128 = vmatpush1.msra.mxu0 0.0
  %129 = vmatprep.subr.mxu0 0.0
  %130 = vmatpush1.msra.mxu0 0.0
  %131 = vmatprep.subr.mxu0 0.0
  %132 = vmatpush1.msra.mxu0 0.0
  %133 = vmatprep.subr.mxu0 0.0
  %134 = vmatpush1.msra.mxu0 0.0
  %135 = vmatprep.subr.mxu0 0.0
  %136 = vmatpush1.msra.mxu0 0.0
  %137 = vmatprep.subr.mxu0 0.0
  %138 = vmatpush1.msra.mxu0 0.0
  %139 = vmatprep.subr.mxu0 0.0
  %140 = vmatpush1.msra.mxu0 0.0
  %141 = vmatprep.subr.mxu0 0.0
  %142 = vmatpush1.msra.mxu0 0.0
  %143 = vmatprep.subr.mxu0 0.0
  %144 = vmatpush1.msra.mxu0 0.0
  %145 = vmatprep.subr.mxu0 0.0
  %146 = vmatpush1.msra.mxu0 0.0
  %147 = vmatprep.subr.mxu0 0.0
  %148 = vmatpush1.msra.mxu0 0.0
  %149 = vmatprep.subr.mxu0 0.0
  %150 = vmatpush1.msra.mxu0 0.0
  %151 = vmatprep.subr.mxu0 0.0
  %152 = vmatpush1.msra.mxu0 0.0
  %153 = vmatprep.subr.mxu0 0.0
  %154 = vmatpush1.msra.mxu0 0.0
  %155 = vmatprep.subr.mxu0 0.0
  %156 = vmatpush1.msra.mxu0 0.0
  %157 = vmatprep.subr.mxu0 0.0
  %158 = vmatpush1.msra.mxu0 0.0
  %159 = vmatprep.subr.mxu0 0.0
  %160 = vmatpush1.msra.mxu0 0.0
  %161 = vmatprep.subr.mxu0 0.0
  %162 = vmatpush1.msra.mxu0 0.0
  %163 = vmatprep.subr.mxu0 0.0
  %164 = vmatpush1.msra.mxu0 0.0
  %165 = vmatprep.subr.mxu0 0.0
  %166 = vmatpush1.msra.mxu0 0.0
  %167 = vmatprep.subr.mxu0 0.0
  %168 = vmatpush1.msra.mxu0 0.0
  %169 = vmatprep.subr.mxu0 0.0
  %170 = vmatpush1.msra.mxu0 0.0
  %171 = vmatprep.subr.mxu0 0.0
  %172 = vmatpush1.msra.mxu0 0.0
  %173 = vmatprep.subr.mxu0 0.0
  %174 = vmatpush1.msra.mxu0 0.0
  %175 = vmatprep.subr.mxu0 0.0
  %176 = vmatpush1.msra.mxu0 0.0
  %177 = vmatprep.subr.mxu0 0.0
  %178 = vmatpush1.msra.mxu0 0.0
  %179 = vmatprep.subr.mxu0 0.0
  %180 = vmatpush1.msra.mxu0 0.0
  %181 = vmatprep.mubr.f32.mxu0 0.0
  %182 = vmatmul.mubr.f32.gmra.mrb[0].mxu0 %v115
  %v183 = vpop.f32.mrb[0].mxu0
  %v184 = vadd.f32 0.0, %v183
  %v185 = vpop.f32.mrb[0].mxu0
  %186 = vdwg.mxu0
  %v187 = vadd.f32 %v73, %v184
  %v188 = vld [vmem:[%s3] sm:$0xf]
  %v190 = vsel %vm113, %v188, 0
  %192 = vmatprep.subr.mxu0 0.0
  %193 = vmatpush1.msra.mxu0 %v110
  %194 = vmatprep.subr.mxu0 0.0
  %195 = vmatpush1.msra.mxu0 %v111
  %196 = vmatprep.subr.mxu0 0.0
  %197 = vmatpush1.msra.mxu0 0.0
  %198 = vmatprep.subr.mxu0 0.0
  %199 = vmatpush1.msra.mxu0 0.0
  %200 = vmatprep.subr.mxu0 0.0
  %201 = vmatpush1.msra.mxu0 0.0
  %202 = vmatprep.subr.mxu0 0.0
  %203 = vmatpush1.msra.mxu0 0.0
  %204 = vmatprep.subr.mxu0 0.0
  %205 = vmatpush1.msra.mxu0 0.0
  %206 = vmatprep.subr.mxu0 0.0
  %207 = vmatpush1.msra.mxu0 0.0
  %208 = vmatprep.subr.mxu0 0.0
  %209 = vmatpush1.msra.mxu0 0.0
  %210 = vmatprep.subr.mxu0 0.0
  %211 = vmatpush1.msra.mxu0 0.0
  %212 = vmatprep.subr.mxu0 0.0
  %213 = vmatpush1.msra.mxu0 0.0
  %214 = vmatprep.subr.mxu0 0.0
  %215 = vmatpush1.msra.mxu0 0.0
  %216 = vmatprep.subr.mxu0 0.0
  %217 = vmatpush1.msra.mxu0 0.0
  %218 = vmatprep.subr.mxu0 0.0
  %219 = vmatpush1.msra.mxu0 0.0
  %220 = vmatprep.subr.mxu0 0.0
  %221 = vmatpush1.msra.mxu0 0.0
  %222 = vmatprep.subr.mxu0 0.0
  %223 = vmatpush1.msra.mxu0 0.0
  %224 = vmatprep.subr.mxu0 0.0
  %225 = vmatpush1.msra.mxu0 0.0
  %226 = vmatprep.subr.mxu0 0.0
  %227 = vmatpush1.msra.mxu0 0.0
  %228 = vmatprep.subr.mxu0 0.0
  %229 = vmatpush1.msra.mxu0 0.0
  %230 = vmatprep.subr.mxu0 0.0
  %231 = vmatpush1.msra.mxu0 0.0
  %232 = vmatprep.subr.mxu0 0.0
  %233 = vmatpush1.msra.mxu0 0.0
  %234 = vmatprep.subr.mxu0 0.0
  %235 = vmatpush1.msra.mxu0 0.0
  %236 = vmatprep.subr.mxu0 0.0
  %237 = vmatpush1.msra.mxu0 0.0
  %238 = vmatprep.subr.mxu0 0.0
  %239 = vmatpush1.msra.mxu0 0.0
  %240 = vmatprep.subr.mxu0 0.0
  %241 = vmatpush1.msra.mxu0 0.0
  %242 = vmatprep.subr.mxu0 0.0
  %243 = vmatpush1.msra.mxu0 0.0
  %244 = vmatprep.subr.mxu0 0.0
  %245 = vmatpush1.msra.mxu0 0.0
  %246 = vmatprep.subr.mxu0 0.0
  %247 = vmatpush1.msra.mxu0 0.0
  %248 = vmatprep.subr.mxu0 0.0
  %249 = vmatpush1.msra.mxu0 0.0
  %250 = vmatprep.subr.mxu0 0.0
  %251 = vmatpush1.msra.mxu0 0.0
  %252 = vmatprep.subr.mxu0 0.0
  %253 = vmatpush1.msra.mxu0 0.0
  %254 = vmatprep.subr.mxu0 0.0
  %255 = vmatpush1.msra.mxu0 0.0
  %256 = vmatprep.mubr.f32.mxu0 0.0
  %257 = vmatmul.mubr.f32.gmra.mrb[0].mxu0 %v190
  %v258 = vpop.f32.mrb[0].mxu0
  %v259 = vadd.f32 0.0, %v258
  %v260 = vpop.f32.mrb[0].mxu0
  %261 = vdwg.mxu0
  %v262 = vadd.f32 %v79, %v259
  %v263 = vmax.f32 %v187, 0.0
  %v264 = vmax.f32 %v262, 0.0
  %vm265 = vcmask 261120
  %v267 = vsel %vm265, %v263, 0
  %269 = vmatprep.subr.mxu0 0.0
  %270 = vmatpush1.msra.mxu0 %v64
  %271 = vmatprep.subr.mxu0 0.0
  %272 = vmatpush1.msra.mxu0 %v65
  %273 = vmatprep.subr.mxu0 0.0
  %274 = vmatpush1.msra.mxu0 %v66
  %275 = vmatprep.subr.mxu0 0.0
  %276 = vmatpush1.msra.mxu0 %v67
  %277 = vmatprep.subr.mxu0 0.0
  %278 = vmatpush1.msra.mxu0 0.0
  %279 = vmatprep.subr.mxu0 0.0
  %280 = vmatpush1.msra.mxu0 0.0
  %281 = vmatprep.subr.mxu0 0.0
  %282 = vmatpush1.msra.mxu0 0.0
  %283 = vmatprep.subr.mxu0 0.0
  %284 = vmatpush1.msra.mxu0 0.0
  %285 = vmatprep.subr.mxu0 0.0
  %286 = vmatpush1.msra.mxu0 0.0
  %287 = vmatprep.subr.mxu0 0.0
  %288 = vmatpush1.msra.mxu0 0.0
  %289 = vmatprep.subr.mxu0 0.0
  %290 = vmatpush1.msra.mxu0 0.0
  %291 = vmatprep.subr.mxu0 0.0
  %292 = vmatpush1.msra.mxu0 0.0
  %293 = vmatprep.subr.mxu0 0.0
  %294 = vmatpush1.msra.mxu0 0.0
  %295 = vmatprep.subr.mxu0 0.0
  %296 = vmatpush1.msra.mxu0 0.0
  %297 = vmatprep.subr.mxu0 0.0
  %298 = vmatpush1.msra.mxu0 0.0
  %299 = vmatprep.subr.mxu0 0.0
  %300 = vmatpush1.msra.mxu0 0.0
  %301 = vmatprep.subr.mxu0 0.0
  %302 = vmatpush1.msra.mxu0 0.0
  %303 = vmatprep.subr.mxu0 0.0
  %304 = vmatpush1.msra.mxu0 0.0
  %305 = vmatprep.subr.mxu0 0.0
  %306 = vmatpush1.msra.mxu0 0.0
  %307 = vmatprep.subr.mxu0 0.0
  %308 = vmatpush1.msra.mxu0 0.0
  %309 = vmatprep.subr.mxu0 0.0
  %310 = vmatpush1.msra.mxu0 0.0
  %311 = vmatprep.subr.mxu0 0.0
  %312 = vmatpush1.msra.mxu0 0.0
  %313 = vmatprep.subr.mxu0 0.0
  %314 = vmatpush1.msra.mxu0 0.0
  %315 = vmatprep.subr.mxu0 0.0
  %316 = vmatpush1.msra.mxu0 0.0
  %317 = vmatprep.subr.mxu0 0.0
  %318 = vmatpush1.msra.mxu0 0.0
  %319 = vmatprep.subr.mxu0 0.0
  %320 = vmatpush1.msra.mxu0 0.0
  %321 = vmatprep.subr.mxu0 0.0
  %322 = vmatpush1.msra.mxu0 0.0
  %323 = vmatprep.subr.mxu0 0.0
  %324 = vmatpush1.msra.mxu0 0.0
  %325 = vmatprep.subr.mxu0 0.0
  %326 = vmatpush1.msra.mxu0 0.0
  %327 = vmatprep.subr.mxu0 0.0
  %328 = vmatpush1.msra.mxu0 0.0
  %329 = vmatprep.subr.mxu0 0.0
  %330 = vmatpush1.msra.mxu0 0.0
  %331 = vmatprep.subr.mxu0 0.0
  %332 = vmatpush1.msra.mxu0 0.0
  %333 = vmatprep.mubr.f32.mxu0 0.0
  %334 = vmatmul.mubr.f32.gmra.mrb[0].mxu0 %v267
  %v335 = vpop.f32.mrb[0].mxu0
  %v336 = vadd.f32 0.0, %v335
  %v337 = vpop.f32.mrb[0].mxu0
  %338 = vdwg.mxu0
  %vm339 = vcmask 11264
  %340 = vst.msk [vmem:[%s11] sm:$0xf] %vm339, %v336
  %v341 = vld [vmem:[%s6] sm:$0xf]
  %343 = vset.pattern.permute.xlu0 0
  %344 = vperm.xlu0 %343, %v341
  %v345 = vpop.permute.xlu0 %344
  %v347 = vld [vmem:[%s8] sm:$0xf]
  %349 = vset.pattern.permute.xlu0 0
  %350 = vperm.xlu0 %349, %v347
  %v351 = vpop.permute.xlu0 %350
  %v353 = vld [vmem:[%s0] sm:$0x1]
  %v354 = vlaneseq
  %v355 = vshrl.u32 %v354, 7
  %v356 = vsub.s32 0, %v355
  %v357 = vrot.slane %v353, %v356
  %v358 = vmul.f32 %v357, %v264
  %359 = vst.msk [vmem:[#allocation2] sm:$0xf] %vm87, %v358
  %v360 = vld [vmem:[%s0 + $0x1] sm:$0x1]
  %v361 = vlaneseq
  %v362 = vshrl.u32 %v361, 7
  %v363 = vsub.s32 0, %v362
  %v364 = vrot.slane %v360, %v363
  %v365 = vmul.f32 %v364, %v264
  %366 = vst.msk [vmem:[#allocation2 + $0x4] sm:$0xf] %vm87, %v365
  %v367 = vld [vmem:[%s0 + $0x2] sm:$0x1]
  %v368 = vlaneseq
  %v369 = vshrl.u32 %v368, 7
  %v370 = vsub.s32 0, %v369
  %v371 = vrot.slane %v367, %v370
  %v372 = vmul.f32 %v371, %v264
  %373 = vst.msk [vmem:[#allocation2 + $0x8] sm:$0xf] %vm87, %v372
  %v374 = vld [vmem:[%s0 + $0x3] sm:$0x1]
  %v375 = vlaneseq
  %v376 = vshrl.u32 %v375, 7
  %v377 = vsub.s32 0, %v376
  %v378 = vrot.slane %v374, %v377
  %v379 = vmul.f32 %v378, %v264
  %380 = vst.msk [vmem:[#allocation2 + $0xc] sm:$0xf] %vm87, %v379
  %v381 = vld [vmem:[#allocation2] sm:$0xff]
  %v382 = vld [vmem:[#allocation2 + $0x8] sm:$0xff]
  %v383 = vld [vmem:[%s5] sm:$0xf]
  %v385 = vsel %vm113, %v383, 0
  %387 = vmatprep.subr.mxu0 0.0
  %388 = vmatpush1.msra.mxu0 %v381
  %389 = vmatprep.subr.mxu0 0.0
  %390 = vmatpush1.msra.mxu0 %v382
  %391 = vmatprep.subr.mxu0 0.0
  %392 = vmatpush1.msra.mxu0 0.0
  %393 = vmatprep.subr.mxu0 0.0
  %394 = vmatpush1.msra.mxu0 0.0
  %395 = vmatprep.subr.mxu0 0.0
  %396 = vmatpush1.msra.mxu0 0.0
  %397 = vmatprep.subr.mxu0 0.0
  %398 = vmatpush1.msra.mxu0 0.0
  %399 = vmatprep.subr.mxu0 0.0
  %400 = vmatpush1.msra.mxu0 0.0
  %401 = vmatprep.subr.mxu0 0.0
  %402 = vmatpush1.msra.mxu0 0.0
  %403 = vmatprep.subr.mxu0 0.0
  %404 = vmatpush1.msra.mxu0 0.0
  %405 = vmatprep.subr.mxu0 0.0
  %406 = vmatpush1.msra.mxu0 0.0
  %407 = vmatprep.subr.mxu0 0.0
  %408 = vmatpush1.msra.mxu0 0.0
  %409 = vmatprep.subr.mxu0 0.0
  %410 = vmatpush1.msra.mxu0 0.0
  %411 = vmatprep.subr.mxu0 0.0
  %412 = vmatpush1.msra.mxu0 0.0
  %413 = vmatprep.subr.mxu0 0.0
  %414 = vmatpush1.msra.mxu0 0.0
  %415 = vmatprep.subr.mxu0 0.0
  %416 = vmatpush1.msra.mxu0 0.0
  %417 = vmatprep.subr.mxu0 0.0
  %418 = vmatpush1.msra.mxu0 0.0
  %419 = vmatprep.subr.mxu0 0.0
  %420 = vmatpush1.msra.mxu0 0.0
  %421 = vmatprep.subr.mxu0 0.0
  %422 = vmatpush1.msra.mxu0 0.0
  %423 = vmatprep.subr.mxu0 0.0
  %424 = vmatpush1.msra.mxu0 0.0
  %425 = vmatprep.subr.mxu0 0.0
  %426 = vmatpush1.msra.mxu0 0.0
  %427 = vmatprep.subr.mxu0 0.0
  %428 = vmatpush1.msra.mxu0 0.0
  %429 = vmatprep.subr.mxu0 0.0
  %430 = vmatpush1.msra.mxu0 0.0
  %431 = vmatprep.subr.mxu0 0.0
  %432 = vmatpush1.msra.mxu0 0.0
  %433 = vmatprep.subr.mxu0 0.0
  %434 = vmatpush1.msra.mxu0 0.0
  %435 = vmatprep.subr.mxu0 0.0
  %436 = vmatpush1.msra.mxu0 0.0
  %437 = vmatprep.subr.mxu0 0.0
  %438 = vmatpush1.msra.mxu0 0.0
  %439 = vmatprep.subr.mxu0 0.0
  %440 = vmatpush1.msra.mxu0 0.0
  %441 = vmatprep.subr.mxu0 0.0
  %442 = vmatpush1.msra.mxu0 0.0
  %443 = vmatprep.subr.mxu0 0.0
  %444 = vmatpush1.msra.mxu0 0.0
  %445 = vmatprep.subr.mxu0 0.0
  %446 = vmatpush1.msra.mxu0 0.0
  %447 = vmatprep.subr.mxu0 0.0
  %448 = vmatpush1.msra.mxu0 0.0
  %449 = vmatprep.subr.mxu0 0.0
  %450 = vmatpush1.msra.mxu0 0.0
  %451 = vmatprep.mubr.f32.mxu0 0.0
  %452 = vmatmul.mubr.f32.gmra.mrb[0].mxu0 %v385
  %v453 = vpop.f32.mrb[0].mxu0
  %v454 = vadd.f32 0.0, %v453
  %v455 = vpop.f32.mrb[0].mxu0
  %456 = vdwg.mxu0
  %v457 = vadd.f32 %v345, %v454
  %v458 = vld [vmem:[%s7] sm:$0xf]
  %v460 = vsel %vm113, %v458, 0
  %462 = vmatprep.subr.mxu0 0.0
  %463 = vmatpush1.msra.mxu0 %v381
  %464 = vmatprep.subr.mxu0 0.0
  %465 = vmatpush1.msra.mxu0 %v382
  %466 = vmatprep.subr.mxu0 0.0
  %467 = vmatpush1.msra.mxu0 0.0
  %468 = vmatprep.subr.mxu0 0.0
  %469 = vmatpush1.msra.mxu0 0.0
  %470 = vmatprep.subr.mxu0 0.0
  %471 = vmatpush1.msra.mxu0 0.0
  %472 = vmatprep.subr.mxu0 0.0
  %473 = vmatpush1.msra.mxu0 0.0
  %474 = vmatprep.subr.mxu0 0.0
  %475 = vmatpush1.msra.mxu0 0.0
  %476 = vmatprep.subr.mxu0 0.0
  %477 = vmatpush1.msra.mxu0 0.0
  %478 = vmatprep.subr.mxu0 0.0
  %479 = vmatpush1.msra.mxu0 0.0
  %480 = vmatprep.subr.mxu0 0.0
  %481 = vmatpush1.msra.mxu0 0.0
  %482 = vmatprep.subr.mxu0 0.0
  %483 = vmatpush1.msra.mxu0 0.0
  %484 = vmatprep.subr.mxu0 0.0
  %485 = vmatpush1.msra.mxu0 0.0
  %486 = vmatprep.subr.mxu0 0.0
  %487 = vmatpush1.msra.mxu0 0.0
  %488 = vmatprep.subr.mxu0 0.0
  %489 = vmatpush1.msra.mxu0 0.0
  %490 = vmatprep.subr.mxu0 0.0
  %491 = vmatpush1.msra.mxu0 0.0
  %492 = vmatprep.subr.mxu0 0.0
  %493 = vmatpush1.msra.mxu0 0.0
  %494 = vmatprep.subr.mxu0 0.0
  %495 = vmatpush1.msra.mxu0 0.0
  %496 = vmatprep.subr.mxu0 0.0
  %497 = vmatpush1.msra.mxu0 0.0
  %498 = vmatprep.subr.mxu0 0.0
  %499 = vmatpush1.msra.mxu0 0.0
  %500 = vmatprep.subr.mxu0 0.0
  %501 = vmatpush1.msra.mxu0 0.0
  %502 = vmatprep.subr.mxu0 0.0
  %503 = vmatpush1.msra.mxu0 0.0
  %504 = vmatprep.subr.mxu0 0.0
  %505 = vmatpush1.msra.mxu0 0.0
  %506 = vmatprep.subr.mxu0 0.0
  %507 = vmatpush1.msra.mxu0 0.0
  %508 = vmatprep.subr.mxu0 0.0
  %509 = vmatpush1.msra.mxu0 0.0
  %510 = vmatprep.subr.mxu0 0.0
  %511 = vmatpush1.msra.mxu0 0.0
  %512 = vmatprep.subr.mxu0 0.0
  %513 = vmatpush1.msra.mxu0 0.0
  %514 = vmatprep.subr.mxu0 0.0
  %515 = vmatpush1.msra.mxu0 0.0
  %516 = vmatprep.subr.mxu0 0.0
  %517 = vmatpush1.msra.mxu0 0.0
  %518 = vmatprep.subr.mxu0 0.0
  %519 = vmatpush1.msra.mxu0 0.0
  %520 = vmatprep.subr.mxu0 0.0
  %521 = vmatpush1.msra.mxu0 0.0
  %522 = vmatprep.subr.mxu0 0.0
  %523 = vmatpush1.msra.mxu0 0.0
  %524 = vmatprep.subr.mxu0 0.0
  %525 = vmatpush1.msra.mxu0 0.0
  %526 = vmatprep.mubr.f32.mxu0 0.0
  %527 = vmatmul.mubr.f32.gmra.mrb[0].mxu0 %v460
  %v528 = vpop.f32.mrb[0].mxu0
  %v529 = vadd.f32 0.0, %v528
  %v530 = vpop.f32.mrb[0].mxu0
  %531 = vdwg.mxu0
  %v532 = vadd.f32 %v351, %v529
  %v533 = vmax.f32 %v457, 0.0
  %v534 = vmax.f32 %v532, 0.0
  %v536 = vsel %vm265, %v533, 0
  %538 = vmatprep.subr.mxu0 0.0
  %539 = vmatpush1.msra.mxu0 %v64
  %540 = vmatprep.subr.mxu0 0.0
  %541 = vmatpush1.msra.mxu0 %v65
  %542 = vmatprep.subr.mxu0 0.0
  %543 = vmatpush1.msra.mxu0 %v66
  %544 = vmatprep.subr.mxu0 0.0
  %545 = vmatpush1.msra.mxu0 %v67
  %546 = vmatprep.subr.mxu0 0.0
  %547 = vmatpush1.msra.mxu0 0.0
  %548 = vmatprep.subr.mxu0 0.0
  %549 = vmatpush1.msra.mxu0 0.0
  %550 = vmatprep.subr.mxu0 0.0
  %551 = vmatpush1.msra.mxu0 0.0
  %552 = vmatprep.subr.mxu0 0.0
  %553 = vmatpush1.msra.mxu0 0.0
  %554 = vmatprep.subr.mxu0 0.0
  %555 = vmatpush1.msra.mxu0 0.0
  %556 = vmatprep.subr.mxu0 0.0
  %557 = vmatpush1.msra.mxu0 0.0
  %558 = vmatprep.subr.mxu0 0.0
  %559 = vmatpush1.msra.mxu0 0.0
  %560 = vmatprep.subr.mxu0 0.0
  %561 = vmatpush1.msra.mxu0 0.0
  %562 = vmatprep.subr.mxu0 0.0
  %563 = vmatpush1.msra.mxu0 0.0
  %564 = vmatprep.subr.mxu0 0.0
  %565 = vmatpush1.msra.mxu0 0.0
  %566 = vmatprep.subr.mxu0 0.0
  %567 = vmatpush1.msra.mxu0 0.0
  %568 = vmatprep.subr.mxu0 0.0
  %569 = vmatpush1.msra.mxu0 0.0
  %570 = vmatprep.subr.mxu0 0.0
  %571 = vmatpush1.msra.mxu0 0.0
  %572 = vmatprep.subr.mxu0 0.0
  %573 = vmatpush1.msra.mxu0 0.0
  %574 = vmatprep.subr.mxu0 0.0
  %575 = vmatpush1.msra.mxu0 0.0
  %576 = vmatprep.subr.mxu0 0.0
  %577 = vmatpush1.msra.mxu0 0.0
  %578 = vmatprep.subr.mxu0 0.0
  %579 = vmatpush1.msra.mxu0 0.0
  %580 = vmatprep.subr.mxu0 0.0
  %581 = vmatpush1.msra.mxu0 0.0
  %582 = vmatprep.subr.mxu0 0.0
  %583 = vmatpush1.msra.mxu0 0.0
  %584 = vmatprep.subr.mxu0 0.0
  %585 = vmatpush1.msra.mxu0 0.0
  %586 = vmatprep.subr.mxu0 0.0
  %587 = vmatpush1.msra.mxu0 0.0
  %588 = vmatprep.subr.mxu0 0.0
  %589 = vmatpush1.msra.mxu0 0.0
  %590 = vmatprep.subr.mxu0 0.0
  %591 = vmatpush1.msra.mxu0 0.0
  %592 = vmatprep.subr.mxu0 0.0
  %593 = vmatpush1.msra.mxu0 0.0
  %594 = vmatprep.subr.mxu0 0.0
  %595 = vmatpush1.msra.mxu0 0.0
  %596 = vmatprep.subr.mxu0 0.0
  %597 = vmatpush1.msra.mxu0 0.0
  %598 = vmatprep.subr.mxu0 0.0
  %599 = vmatpush1.msra.mxu0 0.0
  %600 = vmatprep.subr.mxu0 0.0
  %601 = vmatpush1.msra.mxu0 0.0
  %602 = vmatprep.mubr.f32.mxu0 0.0
  %603 = vmatmul.mubr.f32.gmra.mrb[0].mxu0 %v536
  %v604 = vpop.f32.mrb[0].mxu0
  %v605 = vadd.f32 0.0, %v604
  %v606 = vpop.f32.mrb[0].mxu0
  %607 = vdwg.mxu0
  %608 = vst.msk [vmem:[%s11 + $0x8] sm:$0xf] %vm339, %v605
  %v609 = vld [vmem:[%s10] sm:$0xf]
  %611 = vset.pattern.permute.xlu0 0
  %612 = vperm.xlu0 %611, %v609
  %v613 = vpop.permute.xlu0 %612
  %v615 = vld [vmem:[%s0] sm:$0x1]
  %v616 = vlaneseq
  %v617 = vshrl.u32 %v616, 7
  %v618 = vsub.s32 0, %v617
  %v619 = vrot.slane %v615, %v618
  %v620 = vmul.f32 %v619, %v534
  %621 = vst.msk [vmem:[#allocation2] sm:$0xf] %vm87, %v620
  %v622 = vld [vmem:[%s0 + $0x1] sm:$0x1]
  %v623 = vlaneseq
  %v624 = vshrl.u32 %v623, 7
  %v625 = vsub.s32 0, %v624
  %v626 = vrot.slane %v622, %v625
  %v627 = vmul.f32 %v626, %v534
  %628 = vst.msk [vmem:[#allocation2 + $0x4] sm:$0xf] %vm87, %v627
  %v629 = vld [vmem:[%s0 + $0x2] sm:$0x1]
  %v630 = vlaneseq
  %v631 = vshrl.u32 %v630, 7
  %v632 = vsub.s32 0, %v631
  %v633 = vrot.slane %v629, %v632
  %v634 = vmul.f32 %v633, %v534
  %635 = vst.msk [vmem:[#allocation2 + $0x8] sm:$0xf] %vm87, %v634
  %v636 = vld [vmem:[%s0 + $0x3] sm:$0x1]
  %v637 = vlaneseq
  %v638 = vshrl.u32 %v637, 7
  %v639 = vsub.s32 0, %v638
  %v640 = vrot.slane %v636, %v639
  %v641 = vmul.f32 %v640, %v534
  %642 = vst.msk [vmem:[#allocation2 + $0xc] sm:$0xf] %vm87, %v641
  %v643 = vld [vmem:[#allocation2] sm:$0xff]
  %v644 = vld [vmem:[#allocation2 + $0x8] sm:$0xff]
  %v645 = vld [vmem:[%s9] sm:$0xf]
  %v647 = vsel %vm113, %v645, 0
  %649 = vmatprep.subr.mxu0 0.0
  %650 = vmatpush1.msra.mxu0 %v643
  %651 = vmatprep.subr.mxu0 0.0
  %652 = vmatpush1.msra.mxu0 %v644
  %653 = vmatprep.subr.mxu0 0.0
  %654 = vmatpush1.msra.mxu0 0.0
  %655 = vmatprep.subr.mxu0 0.0
  %656 = vmatpush1.msra.mxu0 0.0
  %657 = vmatprep.subr.mxu0 0.0
  %658 = vmatpush1.msra.mxu0 0.0
  %659 = vmatprep.subr.mxu0 0.0
  %660 = vmatpush1.msra.mxu0 0.0
  %661 = vmatprep.subr.mxu0 0.0
  %662 = vmatpush1.msra.mxu0 0.0
  %663 = vmatprep.subr.mxu0 0.0
  %664 = vmatpush1.msra.mxu0 0.0
  %665 = vmatprep.subr.mxu0 0.0
  %666 = vmatpush1.msra.mxu0 0.0
  %667 = vmatprep.subr.mxu0 0.0
  %668 = vmatpush1.msra.mxu0 0.0
  %669 = vmatprep.subr.mxu0 0.0
  %670 = vmatpush1.msra.mxu0 0.0
  %671 = vmatprep.subr.mxu0 0.0
  %672 = vmatpush1.msra.mxu0 0.0
  %673 = vmatprep.subr.mxu0 0.0
  %674 = vmatpush1.msra.mxu0 0.0
  %675 = vmatprep.subr.mxu0 0.0
  %676 = vmatpush1.msra.mxu0 0.0
  %677 = vmatprep.subr.mxu0 0.0
  %678 = vmatpush1.msra.mxu0 0.0
  %679 = vmatprep.subr.mxu0 0.0
  %680 = vmatpush1.msra.mxu0 0.0
  %681 = vmatprep.subr.mxu0 0.0
  %682 = vmatpush1.msra.mxu0 0.0
  %683 = vmatprep.subr.mxu0 0.0
  %684 = vmatpush1.msra.mxu0 0.0
  %685 = vmatprep.subr.mxu0 0.0
  %686 = vmatpush1.msra.mxu0 0.0
  %687 = vmatprep.subr.mxu0 0.0
  %688 = vmatpush1.msra.mxu0 0.0
  %689 = vmatprep.subr.mxu0 0.0
  %690 = vmatpush1.msra.mxu0 0.0
  %691 = vmatprep.subr.mxu0 0.0
  %692 = vmatpush1.msra.mxu0 0.0
  %693 = vmatprep.subr.mxu0 0.0
  %694 = vmatpush1.msra.mxu0 0.0
  %695 = vmatprep.subr.mxu0 0.0
  %696 = vmatpush1.msra.mxu0 0.0
  %697 = vmatprep.subr.mxu0 0.0
  %698 = vmatpush1.msra.mxu0 0.0
  %699 = vmatprep.subr.mxu0 0.0
  %700 = vmatpush1.msra.mxu0 0.0
  %701 = vmatprep.subr.mxu0 0.0
  %702 = vmatpush1.msra.mxu0 0.0
  %703 = vmatprep.subr.mxu0 0.0
  %704 = vmatpush1.msra.mxu0 0.0
  %705 = vmatprep.subr.mxu0 0.0
  %706 = vmatpush1.msra.mxu0 0.0
  %707 = vmatprep.subr.mxu0 0.0
  %708 = vmatpush1.msra.mxu0 0.0
  %709 = vmatprep.subr.mxu0 0.0
  %710 = vmatpush1.msra.mxu0 0.0
  %711 = vmatprep.subr.mxu0 0.0
  %712 = vmatpush1.msra.mxu0 0.0
  %713 = vmatprep.mubr.f32.mxu0 0.0
  %714 = vmatmul.mubr.f32.gmra.mrb[0].mxu0 %v647
  %v715 = vpop.f32.mrb[0].mxu0
  %v716 = vadd.f32 0.0, %v715
  %v717 = vpop.f32.mrb[0].mxu0
  %718 = vdwg.mxu0
  %v719 = vadd.f32 %v613, %v716
  %v720 = vmax.f32 %v719, 0.0
  %v722 = vsel %vm265, %v720, 0
  %724 = vmatprep.subr.mxu0 0.0
  %725 = vmatpush1.msra.mxu0 %v64
  %726 = vmatprep.subr.mxu0 0.0
  %727 = vmatpush1.msra.mxu0 %v65
  %728 = vmatprep.subr.mxu0 0.0
  %729 = vmatpush1.msra.mxu0 %v66
  %730 = vmatprep.subr.mxu0 0.0
  %731 = vmatpush1.msra.mxu0 %v67
  %732 = vmatprep.subr.mxu0 0.0
  %733 = vmatpush1.msra.mxu0 0.0
  %734 = vmatprep.subr.mxu0 0.0
  %735 = vmatpush1.msra.mxu0 0.0
  %736 = vmatprep.subr.mxu0 0.0
  %737 = vmatpush1.msra.mxu0 0.0
  %738 = vmatprep.subr.mxu0 0.0
  %739 = vmatpush1.msra.mxu0 0.0
  %740 = vmatprep.subr.mxu0 0.0
  %741 = vmatpush1.msra.mxu0 0.0
  %742 = vmatprep.subr.mxu0 0.0
  %743 = vmatpush1.msra.mxu0 0.0
  %744 = vmatprep.subr.mxu0 0.0
  %745 = vmatpush1.msra.mxu0 0.0
  %746 = vmatprep.subr.mxu0 0.0
  %747 = vmatpush1.msra.mxu0 0.0
  %748 = vmatprep.subr.mxu0 0.0
  %749 = vmatpush1.msra.mxu0 0.0
  %750 = vmatprep.subr.mxu0 0.0
  %751 = vmatpush1.msra.mxu0 0.0
  %752 = vmatprep.subr.mxu0 0.0
  %753 = vmatpush1.msra.mxu0 0.0
  %754 = vmatprep.subr.mxu0 0.0
  %755 = vmatpush1.msra.mxu0 0.0
  %756 = vmatprep.subr.mxu0 0.0
  %757 = vmatpush1.msra.mxu0 0.0
  %758 = vmatprep.subr.mxu0 0.0
  %759 = vmatpush1.msra.mxu0 0.0
  %760 = vmatprep.subr.mxu0 0.0
  %761 = vmatpush1.msra.mxu0 0.0
  %762 = vmatprep.subr.mxu0 0.0
  %763 = vmatpush1.msra.mxu0 0.0
  %764 = vmatprep.subr.mxu0 0.0
  %765 = vmatpush1.msra.mxu0 0.0
  %766 = vmatprep.subr.mxu0 0.0
  %767 = vmatpush1.msra.mxu0 0.0
  %768 = vmatprep.subr.mxu0 0.0
  %769 = vmatpush1.msra.mxu0 0.0
  %770 = vmatprep.subr.mxu0 0.0
  %771 = vmatpush1.msra.mxu0 0.0
  %772 = vmatprep.subr.mxu0 0.0
  %773 = vmatpush1.msra.mxu0 0.0
  %774 = vmatprep.subr.mxu0 0.0
  %775 = vmatpush1.msra.mxu0 0.0
  %776 = vmatprep.subr.mxu0 0.0
  %777 = vmatpush1.msra.mxu0 0.0
  %778 = vmatprep.subr.mxu0 0.0
  %779 = vmatpush1.msra.mxu0 0.0
  %780 = vmatprep.subr.mxu0 0.0
  %781 = vmatpush1.msra.mxu0 0.0
  %782 = vmatprep.subr.mxu0 0.0
  %783 = vmatpush1.msra.mxu0 0.0
  %784 = vmatprep.subr.mxu0 0.0
  %785 = vmatpush1.msra.mxu0 0.0
  %786 = vmatprep.subr.mxu0 0.0
  %787 = vmatpush1.msra.mxu0 0.0
  %788 = vmatprep.mubr.f32.mxu0 0.0
  %789 = vmatmul.mubr.f32.gmra.mrb[0].mxu0 %v722
  %v790 = vpop.f32.mrb[0].mxu0
  %v791 = vadd.f32 0.0, %v790
  %v792 = vpop.f32.mrb[0].mxu0
  %793 = vdwg.mxu0
  %794 = vst.msk [vmem:[%s11 + $0x10] sm:$0xf] %vm339, %v791
  // Predicated region
  $region46: #{tpu_custom_call.1} parent=0 // pred_check
    _
  $region47: #{tpu_custom_call.1} parent=0 // pred_check_branch
    %796 = sbr.rel (0) target = $region49
  $region48: #{tpu_custom_call.1} parent=0 // pred_region
    _
  $region49: #{tpu_custom_call.1} parent=0 // pred_fallthru
    _
  // Predicated region
  $region50: #{tpu_custom_call.1} parent=0 // pred_check
    _
  $region51: #{tpu_custom_call.1} parent=0 // pred_check_branch
    %798 = sbr.rel (0) target = $region53
  $region52: #{tpu_custom_call.1} parent=0 // pred_region
    _
  $region53: #{tpu_custom_call.1} parent=0 // pred_fallthru
    _

</llo_original>
